<compile_context>
chip_gen: v7x
topology: tpu7x:2x2x1
jax: 0.10.0
libtpu: 0.0.40
codegen_flags: <defaults>
</compile_context>

<pallas_src>
import functools

import jax
import jax.numpy as jnp
import numpy as np
from jax import lax
from jax.experimental import pallas as pl
from jax.experimental.pallas import tpu as pltpu


def _round_up(x: int, m: int) -> int:
    return ((x + m - 1) // m) * m


_SENTINEL = -1.0e30      # finite stand-in for -inf during selection (distinct-idx trick)
_SENT_THRESH = -1.0e29   # anything <= this is mapped back to -inf on output


def _rough_scorer_kernel(m_ref, mask_ref, wT_ref, b_ref, mT_ref,
                         ts_ref, ti_ref, h_scr, *, k, kp, tn):
    """Row-tile x column-tile step: linear (once per row tile) + bilinear tile
    + pair mask + streaming top-k merge into the resident output blocks."""
    i = pl.program_id(0)
    j = pl.program_id(1)
    tm = m_ref.shape[0]
    neg_inf = jnp.float32(-jnp.inf)

    @pl.when(j == 0)
    def _():
        # Linear layer once per row tile (hoisted out of both the MC-sample
        # averaging and the column loop); bf16 operands, f32 accumulation.
        h = jnp.dot(m_ref[...], wT_ref[...],
                    preferred_element_type=jnp.float32) + b_ref[...]
        # Fold in the sample-averaged (inverted-dropout scaled) keep mask and
        # cache as bf16 for the bilinear matmul.
        h_scr[...] = (h * mask_ref[...].astype(jnp.float32)).astype(jnp.bfloat16)
        # Running top-k state lives directly in the resident output blocks.
        ts_ref[...] = jnp.full((tm, kp), neg_inf, jnp.float32)
        ti_ref[...] = jnp.zeros((tm, kp), jnp.int32)

    # Bilinear scores for this column tile (bf16 operands, f32 accumulation).
    scores = jnp.dot(h_scr[...], mT_ref[...],
                     preferred_element_type=jnp.float32)               # [TM, TN] f32

    # pair mask: valid antecedent iff global_row > global_col.  Invalid and
    # padded positions get a finite sentinel (mapped back to -inf at the end)
    # so the knockout selection still yields distinct indices for degenerate
    # rows (e.g. row 0), matching torch.topk.
    col = lax.broadcasted_iota(jnp.int32, (tm, tn), 1) + j * tn
    row = lax.broadcasted_iota(jnp.int32, (tm, tn), 0) + i * tm
    sel = jnp.where(row > col, scores, jnp.float32(_SENTINEL))

    # Streaming top-k merge: running (value, idx) buffer ++ this tile.
    cand_v = jnp.concatenate([ts_ref[...], sel], axis=1)               # [TM, KP+TN]
    cand_i = jnp.concatenate([ti_ref[...], col], axis=1)               # [TM, KP+TN]
    big_idx = jnp.int32(2 ** 30)
    for step in range(k):
        vmax = jnp.max(cand_v, axis=1, keepdims=True)                  # [TM, 1]
        is_max = cand_v == vmax
        imin = jnp.min(jnp.where(is_max, cand_i, big_idx), axis=1,
                       keepdims=True)                                  # [TM, 1]
        # Store straight into the output block columns (vst slot, no live
        # lane-sparse vregs, no final concatenate).
        ts_ref[:, pl.ds(step, 1)] = vmax
        ti_ref[:, pl.ds(step, 1)] = imin
        # Knock the selected column out (indices are distinct, so exactly one
        # live candidate is removed per step).
        cand_v = jnp.where(cand_i == imin, neg_inf, cand_v)

    @pl.when(j == pl.num_programs(1) - 1)
    def _():
        v = ts_ref[...]
        ts_ref[...] = jnp.where(v <= jnp.float32(_SENT_THRESH), neg_inf, v)


def mc_dropout_rough_scorer(mentions, weight, bias, *, rough_k, dropout_rate,
                            parameters_samples, dropout_key, col_tile=None):
    """Wrapper: averaged MC-dropout mask, padding/casting, one pallas_call."""
    mentions = jnp.asarray(mentions, jnp.float32)
    n, f = mentions.shape
    k = min(rough_k, n)
    kp = _round_up(max(k, 1), 128)                 # lane-dense output width

    # MC dropout: collapse S samples into one averaged keep-mask.  Exact only
    # because the step after dropout (bilinear product) is linear — which is
    # the scoring_fn=None path being implemented here.
    p = float(dropout_rate)
    if p > 0.0:
        keep = jax.random.bernoulli(dropout_key, 1.0 - p, (parameters_samples, n, f))
        avg_mask = keep.astype(jnp.float32).mean(axis=0) * (1.0 / (1.0 - p))
    else:
        avg_mask = jnp.ones((n, f), jnp.float32)

    # Padding: F to a multiple of 128 (zero padding is exact; 256 alignment is
    # marginally better on v6e/v7x MXUs for large F), rows/cols to 128-multiples.
    fp = _round_up(f, 128)
    tm = 128
    n_row_pad = _round_up(n, tm)
    if col_tile is None:
        tn = min(_round_up(n, 128), max(512, kp))
    else:
        tn = max(_round_up(col_tile, 128), kp)
    n_col_pad = _round_up(n, tn)

    wT = jnp.asarray(weight, jnp.float32).T        # [F_in, F_out]: x @ W.T == x @ wT
    b = jnp.asarray(bias, jnp.float32)

    m_p = jnp.zeros((n_row_pad, fp), jnp.float32).at[:n, :f].set(mentions)
    mask_p = jnp.zeros((n_row_pad, fp), jnp.float32).at[:n, :f].set(avg_mask)
    mT_p = jnp.zeros((fp, n_col_pad), jnp.float32).at[:f, :n].set(mentions.T)
    wT_p = jnp.zeros((fp, fp), jnp.float32).at[:f, :f].set(wT)
    b_p = jnp.zeros((1, fp), jnp.float32).at[0, :f].set(b)

    # bf16 operands for both MXU matmuls (f32 accumulation in-kernel).
    m_bf = m_p.astype(jnp.bfloat16)
    mask_bf = mask_p.astype(jnp.bfloat16)
    mT_bf = mT_p.astype(jnp.bfloat16)
    wT_bf = wT_p.astype(jnp.bfloat16)

    # VMEM budget (double-buffered streamed tiles, single-buffered weights,
    # outputs, scratch) + headroom for in-kernel temporaries.
    est = (2 * tm * fp * 2            # mentions row tile (bf16)
           + 2 * tm * fp * 2          # averaged-mask row tile (bf16)
           + fp * fp * 2              # W^T (bf16, single-buffered)
           + fp * 4                   # bias (f32)
           + 2 * fp * tn * 2          # mentions^T column tile (bf16)
           + 2 * tm * kp * 4          # top-k values output block
           + 2 * tm * kp * 4          # top-k indices output block
           + tm * fp * 2)             # h scratch (bf16)
    est += 6 * tm * (kp + tn) * 4 + (4 << 20)
    vmem_limit = int(min(64 << 20, max(est, 32 << 20)))

    kernel = functools.partial(_rough_scorer_kernel, k=k, kp=kp, tn=tn)

    ts, ti = pl.pallas_call(
        kernel,
        out_shape=(
            jax.ShapeDtypeStruct((n_row_pad, kp), jnp.float32),
            jax.ShapeDtypeStruct((n_row_pad, kp), jnp.int32),
        ),
        grid=(n_row_pad // tm, n_col_pad // tn),
        in_specs=[
            pl.BlockSpec((tm, fp), lambda i, j: (i, 0)),     # mentions row tile
            pl.BlockSpec((tm, fp), lambda i, j: (i, 0)),     # averaged dropout mask tile
            pl.BlockSpec((fp, fp), lambda i, j: (0, 0),
                         pipeline_mode=pl.Buffered(1)),      # W^T (grid-invariant)
            pl.BlockSpec((1, fp), lambda i, j: (0, 0),
                         pipeline_mode=pl.Buffered(1)),      # bias (grid-invariant)
            pl.BlockSpec((fp, tn), lambda i, j: (0, j)),     # mentions^T column tile
        ],
        out_specs=(
            pl.BlockSpec((tm, kp), lambda i, j: (i, 0)),
            pl.BlockSpec((tm, kp), lambda i, j: (i, 0)),
        ),
        scratch_shapes=[pltpu.VMEM((tm, fp), jnp.bfloat16)],  # masked linear output
        compiler_params=pltpu.CompilerParams(
            dimension_semantics=("parallel", "arbitrary"),
            vmem_limit_bytes=vmem_limit),
    )(m_bf, mask_bf, wT_bf, b_p, mT_bf)

    return ts[:n, :k], ti[:n, :k]


def _reference_topk_values(mentions, weight, bias, *, rough_k, dropout_rate,
                           parameters_samples, dropout_key):
    """Pure-JAX reference with the same (bf16-operand, f32-accum) math."""
    n, f = mentions.shape
    k = min(rough_k, n)
    p = float(dropout_rate)
    if p > 0.0:
        keep = jax.random.bernoulli(dropout_key, 1.0 - p, (parameters_samples, n, f))
        avg_mask = keep.astype(jnp.float32).mean(axis=0) * (1.0 / (1.0 - p))
    else:
        avg_mask = jnp.ones((n, f), jnp.float32)
    m_bf = mentions.astype(jnp.bfloat16)
    w_bf = jnp.asarray(weight, jnp.float32).T.astype(jnp.bfloat16)
    mask32 = avg_mask.astype(jnp.bfloat16).astype(jnp.float32)
    h = jnp.dot(m_bf, w_bf, preferred_element_type=jnp.float32) + bias[None, :]
    hm = (h * mask32).astype(jnp.bfloat16)
    bil = jnp.dot(hm, m_bf.T, preferred_element_type=jnp.float32)
    rr = jnp.arange(n)[:, None]
    cc = jnp.arange(n)[None, :]
    ref_scores = jnp.where(rr > cc, bil, -jnp.inf)
    return jax.lax.top_k(ref_scores, k)[0]          # sorted descending


if __name__ == "__main__":
    key = jax.random.PRNGKey(0)

    # ---------- Test 1: small shapes consistent with the module ----------
    N, F, ROUGH_K, DROPOUT, SAMPLES = 16, 32, 4, 0.25, 3
    k_m, k_w, k_b, k_d, key = jax.random.split(key, 5)
    mentions = jax.random.normal(k_m, (N, F), dtype=jnp.float32)
    bound = 1.0 / (F ** 0.5)
    weight = jax.random.uniform(k_w, (F, F), jnp.float32, -bound, bound)   # [out, in]
    bias = jax.random.uniform(k_b, (F,), jnp.float32, -bound, bound)

    top_scores, top_idx = mc_dropout_rough_scorer(
        mentions, weight, bias, rough_k=ROUGH_K, dropout_rate=DROPOUT,
        parameters_samples=SAMPLES, dropout_key=k_d)
    jax.block_until_ready((top_scores, top_idx))

    k_eff = min(ROUGH_K, N)
    assert top_scores.shape == (N, k_eff) and top_idx.shape == (N, k_eff)
    assert top_idx.dtype == jnp.int32

    ref_vals = _reference_topk_values(
        mentions, weight, bias, rough_k=ROUGH_K, dropout_rate=DROPOUT,
        parameters_samples=SAMPLES, dropout_key=k_d)
    assert np.allclose(np.asarray(top_scores), np.asarray(ref_vals),
                       rtol=1e-2, atol=1e-2)
    # Degenerate row 0 (no valid antecedents): -inf values, distinct indices.
    assert np.all(np.isneginf(np.asarray(top_scores[0])))
    assert len(set(np.asarray(top_idx[0]).tolist())) == k_eff

    # ---------- Test 2: exercise the streaming multi-tile path ----------
    N2, F2, ROUGH_K2, DROPOUT2, SAMPLES2 = 300, 40, 7, 0.3, 2
    k_m2, k_w2, k_b2, k_d2, key = jax.random.split(key, 5)
    mentions2 = jax.random.normal(k_m2, (N2, F2), dtype=jnp.float32)
    bound2 = 1.0 / (F2 ** 0.5)
    weight2 = jax.random.uniform(k_w2, (F2, F2), jnp.float32, -bound2, bound2)
    bias2 = jax.random.uniform(k_b2, (F2,), jnp.float32, -bound2, bound2)

    ts2, ti2 = mc_dropout_rough_scorer(
        mentions2, weight2, bias2, rough_k=ROUGH_K2, dropout_rate=DROPOUT2,
        parameters_samples=SAMPLES2, dropout_key=k_d2,
        col_tile=128)                       # force 3 row tiles x 3 column tiles
    jax.block_until_ready((ts2, ti2))

    k2 = min(ROUGH_K2, N2)
    assert ts2.shape == (N2, k2) and ti2.shape == (N2, k2)
    ref_vals2 = _reference_topk_values(
        mentions2, weight2, bias2, rough_k=ROUGH_K2, dropout_rate=DROPOUT2,
        parameters_samples=SAMPLES2, dropout_key=k_d2)
    assert np.allclose(np.asarray(ts2), np.asarray(ref_vals2),
                       rtol=1e-2, atol=1e-2)
    ti2_np = np.asarray(ti2)
    assert np.all((ti2_np >= 0) & (ti2_np < N2))
    assert all(len(set(r.tolist())) == k2 for r in ti2_np)   # distinct per row

    print("KERNEL_OK")
</pallas_src>

<mosaic_0001>
module attributes {stable_mosaic.version = 11 : i64} {
  func.func @_rough_scorer_kernel(%arg0: i32, %arg1: i32, %arg2: memref<128x128xbf16, #tpu.memory_space<vmem>>, %arg3: memref<128x128xbf16, #tpu.memory_space<vmem>>, %arg4: memref<128x128xbf16, #tpu.memory_space<vmem>>, %arg5: memref<1x128xf32, #tpu.memory_space<vmem>>, %arg6: memref<128x128xbf16, #tpu.memory_space<vmem>>, %arg7: memref<128x128xf32, #tpu.memory_space<vmem>>, %arg8: memref<128x128xi32, #tpu.memory_space<vmem>>, %arg9: memref<128x128xbf16, #tpu.memory_space<vmem>>) attributes {dimension_semantics = [#tpu.dimension_semantics<parallel>, #tpu.dimension_semantics<arbitrary>], iteration_bounds = array<i64: 1, 1>, scalar_prefetch = 0 : i64, scratch_operands = 1 : i64, tpu.core_type = #tpu.core_type<tc>, window_params = [{transform_indices = @transform_0, window_bounds = array<i64: 128, 128>}, {transform_indices = @transform_1, window_bounds = array<i64: 128, 128>}, {pipeline_mode = #tpu.pipeline_mode<synchronous>, transform_indices = @transform_2, window_bounds = array<i64: 128, 128>}, {pipeline_mode = #tpu.pipeline_mode<synchronous>, transform_indices = @transform_3, window_bounds = array<i64: 1, 128>}, {transform_indices = @transform_4, window_bounds = array<i64: 128, 128>}, {transform_indices = @transform_5, window_bounds = array<i64: 128, 128>}, {transform_indices = @transform_6, window_bounds = array<i64: 128, 128>}]} {
    %c0_i32 = arith.constant 0 : i32
    %0 = arith.cmpi eq, %arg1, %c0_i32 : i32
    %1 = arith.extui %0 : i1 to i32
    %cst = arith.constant 0xFF800000 : f32
    %c0_i32_0 = arith.constant 0 : i32
    %2 = arith.cmpi ne, %1, %c0_i32_0 : i32
    scf.if %2 {
      %c0_41 = arith.constant 0 : index
      %c0_42 = arith.constant 0 : index
      %76 = vector.load %arg2[%c0_41, %c0_42] : memref<128x128xbf16, #tpu.memory_space<vmem>>, vector<128x128xbf16>
      %c0_43 = arith.constant 0 : index
      %c0_44 = arith.constant 0 : index
      %77 = vector.load %arg4[%c0_43, %c0_44] : memref<128x128xbf16, #tpu.memory_space<vmem>>, vector<128x128xbf16>
      %cst_45 = arith.constant dense<0.000000e+00> : vector<128x128xf32>
      %78 = tpu.matmul %76, %77, %cst_45 {dimension_numbers = #tpu.dot_dimension_numbers<[1], [0], [0], [1], [0, 0, 1, 1], [], []>} : vector<128x128xbf16>, vector<128x128xbf16>, vector<128x128xf32> -> vector<128x128xf32>
      %c0_46 = arith.constant 0 : index
      %c0_47 = arith.constant 0 : index
      %79 = vector.load %arg5[%c0_46, %c0_47] : memref<1x128xf32, #tpu.memory_space<vmem>>, vector<1x128xf32>
      %80 = vector.broadcast %79 : vector<1x128xf32> to vector<128x128xf32>
      %81 = arith.addf %78, %80 : vector<128x128xf32>
      %c0_48 = arith.constant 0 : index
      %c0_49 = arith.constant 0 : index
      %82 = vector.load %arg3[%c0_48, %c0_49] : memref<128x128xbf16, #tpu.memory_space<vmem>>, vector<128x128xbf16>
      %83 = arith.extf %82 : vector<128x128xbf16> to vector<128x128xf32>
      %84 = arith.mulf %81, %83 : vector<128x128xf32>
      %85 = arith.truncf %84 : vector<128x128xf32> to vector<128x128xbf16>
      %c0_50 = arith.constant 0 : index
      %c0_51 = arith.constant 0 : index
      %86 = vector.load %arg9[%c0_50, %c0_51] : memref<128x128xbf16, #tpu.memory_space<vmem>>, vector<128x128xbf16>
      tpu.vector_store %arg9[%c0_50, %c0_51], %85 {strides = array<i32>} : memref<128x128xbf16, #tpu.memory_space<vmem>>, vector<128x128xbf16>,
      %87 = vector.broadcast %cst : f32 to vector<128x128xf32>
      %c0_52 = arith.constant 0 : index
      %c0_53 = arith.constant 0 : index
      %88 = vector.load %arg7[%c0_52, %c0_53] : memref<128x128xf32, #tpu.memory_space<vmem>>, vector<128x128xf32>
      tpu.vector_store %arg7[%c0_52, %c0_53], %87 {strides = array<i32>} : memref<128x128xf32, #tpu.memory_space<vmem>>, vector<128x128xf32>,
      %c0_i32_54 = arith.constant 0 : i32
      %89 = vector.broadcast %c0_i32_54 : i32 to vector<128x128xi32>
      %c0_55 = arith.constant 0 : index
      %c0_56 = arith.constant 0 : index
      %90 = vector.load %arg8[%c0_55, %c0_56] : memref<128x128xi32, #tpu.memory_space<vmem>>, vector<128x128xi32>
      tpu.vector_store %arg8[%c0_55, %c0_56], %89 {strides = array<i32>} : memref<128x128xi32, #tpu.memory_space<vmem>>, vector<128x128xi32>,
    } else {
    }
    %c0 = arith.constant 0 : index
    %c0_1 = arith.constant 0 : index
    %3 = vector.load %arg9[%c0, %c0_1] : memref<128x128xbf16, #tpu.memory_space<vmem>>, vector<128x128xbf16>
    %c0_2 = arith.constant 0 : index
    %c0_3 = arith.constant 0 : index
    %4 = vector.load %arg6[%c0_2, %c0_3] : memref<128x128xbf16, #tpu.memory_space<vmem>>, vector<128x128xbf16>
    %cst_4 = arith.constant dense<0.000000e+00> : vector<128x128xf32>
    %5 = tpu.matmul %3, %4, %cst_4 {dimension_numbers = #tpu.dot_dimension_numbers<[1], [0], [0], [1], [0, 0, 1, 1], [], []>} : vector<128x128xbf16>, vector<128x128xbf16>, vector<128x128xf32> -> vector<128x128xf32>
    %6 = tpu.iota {dimensions = array<i32: 1>} : vector<128x128xi32>
    %c128_i32 = arith.constant 128 : i32
    %7 = arith.muli %arg1, %c128_i32 : i32
    %8 = vector.broadcast %7 : i32 to vector<128x128xi32>
    %9 = arith.addi %6, %8 : vector<128x128xi32>
    %10 = tpu.iota {dimensions = array<i32: 0>} : vector<128x128xi32>
    %c128_i32_5 = arith.constant 128 : i32
    %11 = arith.muli %arg0, %c128_i32_5 : i32
    %12 = vector.broadcast %11 : i32 to vector<128x128xi32>
    %13 = arith.addi %10, %12 : vector<128x128xi32>
    %14 = arith.cmpi sgt, %13, %9 : vector<128x128xi32>
    %cst_6 = arith.constant -1.000000e+30 : f32
    %15 = vector.broadcast %cst_6 : f32 to vector<128x128xf32>
    %16 = arith.select %14, %5, %15 : vector<128x128xi1>, vector<128x128xf32>
    %c0_7 = arith.constant 0 : index
    %c0_8 = arith.constant 0 : index
    %17 = vector.load %arg7[%c0_7, %c0_8] : memref<128x128xf32, #tpu.memory_space<vmem>>, vector<128x128xf32>
    %18 = tpu.concatenate %17, %16 in 1 : vector<128x128xf32>, vector<128x128xf32> -> vector<128x256xf32>
    %c0_9 = arith.constant 0 : index
    %c0_10 = arith.constant 0 : index
    %19 = vector.load %arg8[%c0_9, %c0_10] : memref<128x128xi32, #tpu.memory_space<vmem>>, vector<128x128xi32>
    %20 = tpu.concatenate %19, %9 in 1 : vector<128x128xi32>, vector<128x128xi32> -> vector<128x256xi32>
    %cst_11 = arith.constant dense<0xFF800000> : vector<128xf32>
    %21 = vector.multi_reduction <maximumf>, %18, %cst_11 [1] : vector<128x256xf32> to vector<128xf32>
    %22 = vector.shape_cast %21 : vector<128xf32> to vector<128x1xf32>
    %23 = vector.broadcast %22 : vector<128x1xf32> to vector<128x256xf32>
    %24 = arith.cmpf oeq, %18, %23 : vector<128x256xf32>
    %c1073741824_i32 = arith.constant 1073741824 : i32
    %25 = vector.broadcast %c1073741824_i32 : i32 to vector<128x256xi32>
    %26 = arith.select %24, %20, %25 : vector<128x256xi1>, vector<128x256xi32>
    %cst_12 = arith.constant dense<2147483647> : vector<128xi32>
    %27 = vector.multi_reduction <minsi>, %26, %cst_12 [1] : vector<128x256xi32> to vector<128xi32>
    %28 = vector.shape_cast %27 : vector<128xi32> to vector<128x1xi32>
    %c0_13 = arith.constant 0 : index
    %c0_14 = arith.constant 0 : index
    %29 = vector.load %arg7[%c0_13, %c0_14] : memref<128x128xf32, #tpu.memory_space<vmem>>, vector<128x1xf32>
    tpu.vector_store %arg7[%c0_13, %c0_14], %22 {strides = array<i32>} : memref<128x128xf32, #tpu.memory_space<vmem>>, vector<128x1xf32>,
    %c0_15 = arith.constant 0 : index
    %c0_16 = arith.constant 0 : index
    %30 = vector.load %arg8[%c0_15, %c0_16] : memref<128x128xi32, #tpu.memory_space<vmem>>, vector<128x1xi32>
    tpu.vector_store %arg8[%c0_15, %c0_16], %28 {strides = array<i32>} : memref<128x128xi32, #tpu.memory_space<vmem>>, vector<128x1xi32>,
    %31 = vector.broadcast %28 : vector<128x1xi32> to vector<128x256xi32>
    %32 = arith.cmpi eq, %20, %31 : vector<128x256xi32>
    %cst_17 = arith.constant 0xFF800000 : f32
    %33 = vector.broadcast %cst_17 : f32 to vector<128x256xf32>
    %34 = arith.select %32, %33, %18 : vector<128x256xi1>, vector<128x256xf32>
    %cst_18 = arith.constant dense<0xFF800000> : vector<128xf32>
    %35 = vector.multi_reduction <maximumf>, %34, %cst_18 [1] : vector<128x256xf32> to vector<128xf32>
    %36 = vector.shape_cast %35 : vector<128xf32> to vector<128x1xf32>
    %37 = vector.broadcast %36 : vector<128x1xf32> to vector<128x256xf32>
    %38 = arith.cmpf oeq, %34, %37 : vector<128x256xf32>
    %c1073741824_i32_19 = arith.constant 1073741824 : i32
    %39 = vector.broadcast %c1073741824_i32_19 : i32 to vector<128x256xi32>
    %40 = arith.select %38, %20, %39 : vector<128x256xi1>, vector<128x256xi32>
    %cst_20 = arith.constant dense<2147483647> : vector<128xi32>
    %41 = vector.multi_reduction <minsi>, %40, %cst_20 [1] : vector<128x256xi32> to vector<128xi32>
    %42 = vector.shape_cast %41 : vector<128xi32> to vector<128x1xi32>
    %c0_21 = arith.constant 0 : index
    %c1 = arith.constant 1 : index
    %43 = vector.load %arg7[%c0_21, %c1] : memref<128x128xf32, #tpu.memory_space<vmem>>, vector<128x1xf32>
    tpu.vector_store %arg7[%c0_21, %c1], %36 {strides = array<i32>} : memref<128x128xf32, #tpu.memory_space<vmem>>, vector<128x1xf32>,
    %c0_22 = arith.constant 0 : index
    %c1_23 = arith.constant 1 : index
    %44 = vector.load %arg8[%c0_22, %c1_23] : memref<128x128xi32, #tpu.memory_space<vmem>>, vector<128x1xi32>
    tpu.vector_store %arg8[%c0_22, %c1_23], %42 {strides = array<i32>} : memref<128x128xi32, #tpu.memory_space<vmem>>, vector<128x1xi32>,
    %45 = vector.broadcast %42 : vector<128x1xi32> to vector<128x256xi32>
    %46 = arith.cmpi eq, %20, %45 : vector<128x256xi32>
    %cst_24 = arith.constant 0xFF800000 : f32
    %47 = vector.broadcast %cst_24 : f32 to vector<128x256xf32>
    %48 = arith.select %46, %47, %34 : vector<128x256xi1>, vector<128x256xf32>
    %cst_25 = arith.constant dense<0xFF800000> : vector<128xf32>
    %49 = vector.multi_reduction <maximumf>, %48, %cst_25 [1] : vector<128x256xf32> to vector<128xf32>
    %50 = vector.shape_cast %49 : vector<128xf32> to vector<128x1xf32>
    %51 = vector.broadcast %50 : vector<128x1xf32> to vector<128x256xf32>
    %52 = arith.cmpf oeq, %48, %51 : vector<128x256xf32>
    %c1073741824_i32_26 = arith.constant 1073741824 : i32
    %53 = vector.broadcast %c1073741824_i32_26 : i32 to vector<128x256xi32>
    %54 = arith.select %52, %20, %53 : vector<128x256xi1>, vector<128x256xi32>
    %cst_27 = arith.constant dense<2147483647> : vector<128xi32>
    %55 = vector.multi_reduction <minsi>, %54, %cst_27 [1] : vector<128x256xi32> to vector<128xi32>
    %56 = vector.shape_cast %55 : vector<128xi32> to vector<128x1xi32>
    %c0_28 = arith.constant 0 : index
    %c2 = arith.constant 2 : index
    %57 = vector.load %arg7[%c0_28, %c2] : memref<128x128xf32, #tpu.memory_space<vmem>>, vector<128x1xf32>
    tpu.vector_store %arg7[%c0_28, %c2], %50 {strides = array<i32>} : memref<128x128xf32, #tpu.memory_space<vmem>>, vector<128x1xf32>,
    %c0_29 = arith.constant 0 : index
    %c2_30 = arith.constant 2 : index
    %58 = vector.load %arg8[%c0_29, %c2_30] : memref<128x128xi32, #tpu.memory_space<vmem>>, vector<128x1xi32>
    tpu.vector_store %arg8[%c0_29, %c2_30], %56 {strides = array<i32>} : memref<128x128xi32, #tpu.memory_space<vmem>>, vector<128x1xi32>,
    %59 = vector.broadcast %56 : vector<128x1xi32> to vector<128x256xi32>
    %60 = arith.cmpi eq, %20, %59 : vector<128x256xi32>
    %cst_31 = arith.constant 0xFF800000 : f32
    %61 = vector.broadcast %cst_31 : f32 to vector<128x256xf32>
    %62 = arith.select %60, %61, %48 : vector<128x256xi1>, vector<128x256xf32>
    %cst_32 = arith.constant dense<0xFF800000> : vector<128xf32>
    %63 = vector.multi_reduction <maximumf>, %62, %cst_32 [1] : vector<128x256xf32> to vector<128xf32>
    %64 = vector.shape_cast %63 : vector<128xf32> to vector<128x1xf32>
    %65 = vector.broadcast %64 : vector<128x1xf32> to vector<128x256xf32>
    %66 = arith.cmpf oeq, %62, %65 : vector<128x256xf32>
    %c1073741824_i32_33 = arith.constant 1073741824 : i32
    %67 = vector.broadcast %c1073741824_i32_33 : i32 to vector<128x256xi32>
    %68 = arith.select %66, %20, %67 : vector<128x256xi1>, vector<128x256xi32>
    %cst_34 = arith.constant dense<2147483647> : vector<128xi32>
    %69 = vector.multi_reduction <minsi>, %68, %cst_34 [1] : vector<128x256xi32> to vector<128xi32>
    %70 = vector.shape_cast %69 : vector<128xi32> to vector<128x1xi32>
    %c0_35 = arith.constant 0 : index
    %c3 = arith.constant 3 : index
    %71 = vector.load %arg7[%c0_35, %c3] : memref<128x128xf32, #tpu.memory_space<vmem>>, vector<128x1xf32>
    tpu.vector_store %arg7[%c0_35, %c3], %64 {strides = array<i32>} : memref<128x128xf32, #tpu.memory_space<vmem>>, vector<128x1xf32>,
    %c0_36 = arith.constant 0 : index
    %c3_37 = arith.constant 3 : index
    %72 = vector.load %arg8[%c0_36, %c3_37] : memref<128x128xi32, #tpu.memory_space<vmem>>, vector<128x1xi32>
    tpu.vector_store %arg8[%c0_36, %c3_37], %70 {strides = array<i32>} : memref<128x128xi32, #tpu.memory_space<vmem>>, vector<128x1xi32>,
    %c0_i32_38 = arith.constant 0 : i32
    %73 = arith.cmpi eq, %arg1, %c0_i32_38 : i32
    %74 = arith.extui %73 : i1 to i32
    %cst_39 = arith.constant 0xFF800000 : f32
    %c0_i32_40 = arith.constant 0 : i32
    %75 = arith.cmpi ne, %74, %c0_i32_40 : i32
    scf.if %75 {
      %c0_41 = arith.constant 0 : index
      %c0_42 = arith.constant 0 : index
      %76 = vector.load %arg7[%c0_41, %c0_42] : memref<128x128xf32, #tpu.memory_space<vmem>>, vector<128x128xf32>
      %cst_43 = arith.constant -1.000000e+29 : f32
      %77 = vector.broadcast %cst_43 : f32 to vector<128x128xf32>
      %78 = arith.cmpf ole, %76, %77 : vector<128x128xf32>
      %79 = vector.broadcast %cst_39 : f32 to vector<128x128xf32>
      %80 = arith.select %78, %79, %76 : vector<128x128xi1>, vector<128x128xf32>
      %c0_44 = arith.constant 0 : index
      %c0_45 = arith.constant 0 : index
      %81 = vector.load %arg7[%c0_44, %c0_45] : memref<128x128xf32, #tpu.memory_space<vmem>>, vector<128x128xf32>
      tpu.vector_store %arg7[%c0_44, %c0_45], %80 {strides = array<i32>} : memref<128x128xf32, #tpu.memory_space<vmem>>, vector<128x128xf32>,
    } else {
    }
    return
  }
  func.func @transform_0(%arg0: i32, %arg1: i32) -> (i32, i32) {
    %c0_i32 = arith.constant 0 : i32
    %c0_i32_0 = arith.constant 0 : i32
    return %arg0, %c0_i32 : i32, i32
  }
  func.func @transform_1(%arg0: i32, %arg1: i32) -> (i32, i32) {
    %c0_i32 = arith.constant 0 : i32
    %c0_i32_0 = arith.constant 0 : i32
    return %arg0, %c0_i32 : i32, i32
  }
  func.func @transform_2(%arg0: i32, %arg1: i32) -> (i32, i32) {
    %c0_i32 = arith.constant 0 : i32
    %c0_i32_0 = arith.constant 0 : i32
    %c0_i32_1 = arith.constant 0 : i32
    return %c0_i32, %c0_i32_0 : i32, i32
  }
  func.func @transform_3(%arg0: i32, %arg1: i32) -> (i32, i32) {
    %c0_i32 = arith.constant 0 : i32
    %c0_i32_0 = arith.constant 0 : i32
    %c0_i32_1 = arith.constant 0 : i32
    return %c0_i32, %c0_i32_0 : i32, i32
  }
  func.func @transform_4(%arg0: i32, %arg1: i32) -> (i32, i32) {
    %c0_i32 = arith.constant 0 : i32
    %c0_i32_0 = arith.constant 0 : i32
    return %c0_i32, %arg1 : i32, i32
  }
  func.func @transform_5(%arg0: i32, %arg1: i32) -> (i32, i32) {
    %c0_i32 = arith.constant 0 : i32
    %c0_i32_0 = arith.constant 0 : i32
    return %arg0, %c0_i32 : i32, i32
  }
  func.func @transform_6(%arg0: i32, %arg1: i32) -> (i32, i32) {
    %c0_i32 = arith.constant 0 : i32
    %c0_i32_0 = arith.constant 0 : i32
    return %arg0, %c0_i32 : i32, i32
  }
}

</mosaic_0001>

<llo_original>
// kernel: tpu_custom_call.1
$region0: #{tpu_custom_call.1}
  #allocation0 [shape = 'u32[]', space=smem, size = 0x4, offset = 0x4, fixed_abs, tag = 'smem constant byte address 0x4 - core index']
  #allocation1 [shape = 'u32[144,128]{1,0:T(1,128)}', space=vmem, size = 0x12000, scoped, tag = 'internal scratch']
  #allocation2 [shape = 'bf16[128,128]{1,0:T(16,128)(2,1)}', space=vmem, size = 0x8000, scoped, tag = 'scratch operand']
  %s0 = inlined_call_operand.hbm [shape: bf16[128,128], index: 0, kind: input, shape index: {}]
  %s1 = inlined_call_operand.hbm [shape: bf16[128,128], index: 1, kind: input, shape index: {}]
  %s2 = inlined_call_operand.hbm [shape: bf16[128,128], index: 2, kind: input, shape index: {}]
  %s3 = inlined_call_operand.vmem [shape: f32[1,128], index: 3, kind: input, shape index: {}]
  %s4 = inlined_call_operand.hbm [shape: bf16[128,128], index: 4, kind: input, shape index: {}]
  %s5 = inlined_call_operand.hbm [shape: f32[128,128], index: 5, kind: output, shape index: {0}]
  %s6 = inlined_call_operand.hbm [shape: s32[128,128], index: 6, kind: output, shape index: {1}]
  %7 = xla_tuple %s5, %s6
  %s8 = sld [smem:[#allocation0]]
  $region62: #{tpu_custom_call.1} parent=0
    _
  %s10 = ssub.s32 1, %s8
  %s11 = scalar_select 0, %s10, %s8
  $region1: #{tpu_custom_call.1} parent=0
    #allocation3 [shape = 'u8[32768]{0}', space=vmem, size = 0x8000, scoped, tag = 'input window, operand 0, single buffered']
    #allocation4 [shape = 's32[1]{0}', space=sflag, size = 0x4, scoped, tag = 'scoped memory for tpu_custom_call.1']
    #allocation5 [shape = 's32[1]{0}', space=sflag, size = 0x4, scoped, tag = 'scoped memory for tpu_custom_call.1']
    #allocation6 [shape = 'u8[32768]{0}', space=vmem, size = 0x8000, scoped, tag = 'input window, operand 1, single buffered']
    #allocation7 [shape = 's32[1]{0}', space=sflag, size = 0x4, scoped, tag = 'scoped memory for tpu_custom_call.1']
    #allocation8 [shape = 'u8[32768]{0}', space=vmem, size = 0x8000, scoped, tag = 'input window, operand 2, single buffered']
    #allocation9 [shape = 'u8[32768]{0}', space=vmem, size = 0x8000, scoped, tag = 'input window, operand 4, single buffered']
    #allocation10 [shape = 's32[1]{0}', space=sflag, size = 0x4, scoped, tag = 'scoped memory for tpu_custom_call.1']
    #allocation11 [shape = 'u8[65536]{0}', space=vmem, size = 0x10000, scoped, tag = 'output window, operand 0, single buffered']
    #allocation12 [shape = 'u8[65536]{0}', space=vmem, size = 0x10000, scoped, tag = 'output window, operand 1, single buffered']
    #allocation13 [shape = 's32[1]{0}', space=sflag, size = 0x4, scoped, tag = 'scoped memory for tpu_custom_call.1']
    %12 = vsyncpa [#allocation4], 0
    %13 = vsyncpa [#allocation7], 0
    %14 = vsyncpa [#allocation10], 0
    %15 = vsyncpa [#allocation5], 0
    %16 = vsyncpa [#allocation13], 0
    // Predicated region
    $region2: #{tpu_custom_call.1} parent=1 // pred_check
      _
    $region3: #{tpu_custom_call.1} parent=1 // pred_check_branch
      %18 = sbr.rel (0) target = $region5
    $region4: #{tpu_custom_call.1} parent=1 // pred_region
      %s20 = ssub.s32 1024, 1024
      %21 = vsyncadd [#allocation4], %s20
      %s22 = sshll.u32 [#allocation3], 4
      %s23 = int_to_ptr.vmem [resolvable:$true] %s22
      %28 = dma.hbm_to_vmem [thread:$0]  %s0, 1024, %s23, [#allocation4], 64, 64, 4
    $region5: #{tpu_custom_call.1} parent=1 // pred_fallthru
      _
    // Predicated region
    $region6: #{tpu_custom_call.1} parent=1 // pred_check
      _
    $region7: #{tpu_custom_call.1} parent=1 // pred_check_branch
      %30 = sbr.rel (0) target = $region9
    $region8: #{tpu_custom_call.1} parent=1 // pred_region
      %s32 = ssub.s32 1024, 1024
      %33 = vsyncadd [#allocation7], %s32
      %s34 = sshll.u32 [#allocation6], 4
      %s35 = int_to_ptr.vmem [resolvable:$true] %s34
      %40 = dma.hbm_to_vmem [thread:$0]  %s1, 1024, %s35, [#allocation7], 64, 64, 4
    $region9: #{tpu_custom_call.1} parent=1 // pred_fallthru
      _
    // Predicated region
    $region10: #{tpu_custom_call.1} parent=1 // pred_check
      _
    $region11: #{tpu_custom_call.1} parent=1 // pred_check_branch
      %42 = sbr.rel (0) target = $region13
    $region12: #{tpu_custom_call.1} parent=1 // pred_region
      %s44 = ssub.s32 1024, 1024
      %45 = vsyncadd [#allocation7], %s44
      %s46 = sshll.u32 [#allocation8], 4
      %s47 = int_to_ptr.vmem [resolvable:$true] %s46
      %52 = dma.hbm_to_vmem [thread:$0]  %s2, 1024, %s47, [#allocation7], 64, 64, 4
    $region13: #{tpu_custom_call.1} parent=1 // pred_fallthru
      _
    // Predicated region
    $region14: #{tpu_custom_call.1} parent=1 // pred_check
      _
    $region15: #{tpu_custom_call.1} parent=1 // pred_check_branch
      %54 = sbr.rel (0) target = $region17
    $region16: #{tpu_custom_call.1} parent=1 // pred_region
      _
    $region17: #{tpu_custom_call.1} parent=1 // pred_fallthru
      _
    // Predicated region
    $region18: #{tpu_custom_call.1} parent=1 // pred_check
      _
    $region19: #{tpu_custom_call.1} parent=1 // pred_check_branch
      %56 = sbr.rel (0) target = $region21
    $region20: #{tpu_custom_call.1} parent=1 // pred_region
      %s58 = ssub.s32 1024, 1024
      %59 = vsyncadd [#allocation10], %s58
      %s60 = sshll.u32 [#allocation9], 4
      %s61 = int_to_ptr.vmem [resolvable:$true] %s60
      %66 = dma.hbm_to_vmem [thread:$0]  %s4, 1024, %s61, [#allocation10], 64, 64, 4
    $region21: #{tpu_custom_call.1} parent=1 // pred_fallthru
      _
    // Predicated region
    $region22: #{tpu_custom_call.1} parent=1 // pred_check
      _
    $region23: #{tpu_custom_call.1} parent=1 // pred_check_branch
      %68 = sbr.rel (0) target = $region25
    $region24: #{tpu_custom_call.1} parent=1 // pred_region
      %69 = dma.done [#allocation4], 1024
    $region25: #{tpu_custom_call.1} parent=1 // pred_fallthru
      _
    // Predicated region
    $region26: #{tpu_custom_call.1} parent=1 // pred_check
      _
    $region27: #{tpu_custom_call.1} parent=1 // pred_check_branch
      %71 = sbr.rel (0) target = $region29
    $region28: #{tpu_custom_call.1} parent=1 // pred_region
      %72 = dma.done [#allocation7], 1024
    $region29: #{tpu_custom_call.1} parent=1 // pred_fallthru
      _
    // Predicated region
    $region30: #{tpu_custom_call.1} parent=1 // pred_check
      _
    $region31: #{tpu_custom_call.1} parent=1 // pred_check_branch
      %74 = sbr.rel (0) target = $region33
    $region32: #{tpu_custom_call.1} parent=1 // pred_region
      %75 = dma.done [#allocation7], 1024
    $region33: #{tpu_custom_call.1} parent=1 // pred_fallthru
      _
    // Predicated region
    $region34: #{tpu_custom_call.1} parent=1 // pred_check
      _
    $region35: #{tpu_custom_call.1} parent=1 // pred_check_branch
      %77 = sbr.rel (0) target = $region37
    $region36: #{tpu_custom_call.1} parent=1 // pred_region
      %78 = dma.done [#allocation10], 1024
    $region37: #{tpu_custom_call.1} parent=1 // pred_fallthru
      _
    %p80 = scmp.eq.s32.totalorder 0, 0
    // Predicated region
    $region38: #{tpu_custom_call.1} parent=1 // pred_check
      %p81 = pneg %p80
    $region39: #{tpu_custom_call.1} parent=1 // pred_check_branch
      %83 = sbr.rel (%p81) target = $region41
    $region40: #{tpu_custom_call.1} parent=1 // pred_region
      %v84 = vld [vmem:[#allocation3] sm:$0xf]
      %v85 = vld [vmem:[#allocation3 + $0x4] sm:$0xf]
      %v86 = vld [vmem:[#allocation3 + $0x8] sm:$0xf]
      %v87 = vld [vmem:[#allocation3 + $0xc] sm:$0xf]
      %v88 = vld [vmem:[#allocation3 + $0x10] sm:$0xf]
      %v89 = vld [vmem:[#allocation3 + $0x14] sm:$0xf]
      %v90 = vld [vmem:[#allocation3 + $0x18] sm:$0xf]
      %v91 = vld [vmem:[#allocation3 + $0x1c] sm:$0xf]
      %v92 = vld [vmem:[#allocation3 + $0x20] sm:$0xf]
      %v93 = vld [vmem:[#allocation3 + $0x24] sm:$0xf]
      %v94 = vld [vmem:[#allocation3 + $0x28] sm:$0xf]
      %v95 = vld [vmem:[#allocation3 + $0x2c] sm:$0xf]
      %v96 = vld [vmem:[#allocation3 + $0x30] sm:$0xf]
      %v97 = vld [vmem:[#allocation3 + $0x34] sm:$0xf]
      %v98 = vld [vmem:[#allocation3 + $0x38] sm:$0xf]
      %v99 = vld [vmem:[#allocation3 + $0x3c] sm:$0xf]
      %v100 = vld [vmem:[#allocation8] sm:$0xf]
      %v101 = vld [vmem:[#allocation8 + $0x4] sm:$0xf]
      %v102 = vld [vmem:[#allocation8 + $0x8] sm:$0xf]
      %v103 = vld [vmem:[#allocation8 + $0xc] sm:$0xf]
      %v104 = vld [vmem:[#allocation8 + $0x10] sm:$0xf]
      %v105 = vld [vmem:[#allocation8 + $0x14] sm:$0xf]
      %v106 = vld [vmem:[#allocation8 + $0x18] sm:$0xf]
      %v107 = vld [vmem:[#allocation8 + $0x1c] sm:$0xf]
      %v108 = vld [vmem:[#allocation8 + $0x20] sm:$0xf]
      %v109 = vld [vmem:[#allocation8 + $0x24] sm:$0xf]
      %v110 = vld [vmem:[#allocation8 + $0x28] sm:$0xf]
      %v111 = vld [vmem:[#allocation8 + $0x2c] sm:$0xf]
      %v112 = vld [vmem:[#allocation8 + $0x30] sm:$0xf]
      %v113 = vld [vmem:[#allocation8 + $0x34] sm:$0xf]
      %v114 = vld [vmem:[#allocation8 + $0x38] sm:$0xf]
      %v115 = vld [vmem:[#allocation8 + $0x3c] sm:$0xf]
      %v116 = vld [vmem:[%s3] sm:$0x1]
      %v118 = vlaneseq
      %v119 = vshrl.u32 %v118, 7
      %v120 = vsub.s32 0, %v119
      %v121 = vrot.slane %v116, %v120
      %v139 = vunpack.c.l.b16 %v84
      %v140 = vunpack.c.l.b16 %v85
      %v141 = vunpack.c.l.b16 %v86
      %v142 = vunpack.c.l.b16 %v87
      %v143 = vunpack.c.l.b16 %v88
      %v144 = vunpack.c.l.b16 %v89
      %v145 = vunpack.c.l.b16 %v90
      %v146 = vunpack.c.l.b16 %v91
      %v147 = vunpack.c.l.b16 %v92
      %v148 = vunpack.c.l.b16 %v93
      %v149 = vunpack.c.l.b16 %v94
      %v150 = vunpack.c.l.b16 %v95
      %v151 = vunpack.c.l.b16 %v96
      %v152 = vunpack.c.l.b16 %v97
      %v153 = vunpack.c.l.b16 %v98
      %v154 = vunpack.c.l.b16 %v99
      %v155 = vpack.c.b16 %v140, %v139
      %v156 = vpack.c.b16 %v142, %v141
      %v157 = vpack.c.b16 %v144, %v143
      %v158 = vpack.c.b16 %v146, %v145
      %v159 = vpack.c.b16 %v148, %v147
      %v160 = vpack.c.b16 %v150, %v149
      %v161 = vpack.c.b16 %v152, %v151
      %v162 = vpack.c.b16 %v154, %v153
      %v187 = vunpack.c.l.b16 %v100
      %v188 = vunpack.c.l.b16 %v101
      %v189 = vunpack.c.l.b16 %v102
      %v190 = vunpack.c.l.b16 %v103
      %v191 = vunpack.c.l.b16 %v104
      %v192 = vunpack.c.l.b16 %v105
      %v193 = vunpack.c.l.b16 %v106
      %v194 = vunpack.c.l.b16 %v107
      %v195 = vunpack.c.l.b16 %v108
      %v196 = vunpack.c.l.b16 %v109
      %v197 = vunpack.c.l.b16 %v110
      %v198 = vunpack.c.l.b16 %v111
      %v199 = vunpack.c.l.b16 %v112
      %v200 = vunpack.c.l.b16 %v113
      %v201 = vunpack.c.l.b16 %v114
      %v202 = vunpack.c.l.b16 %v115
      %v203 = vpack.c.b16 %v188, %v187
      %v204 = vpack.c.b16 %v190, %v189
      %v205 = vpack.c.b16 %v192, %v191
      %v206 = vpack.c.b16 %v194, %v193
      %v207 = vpack.c.b16 %v196, %v195
      %v208 = vpack.c.b16 %v198, %v197
      %v209 = vpack.c.b16 %v200, %v199
      %v210 = vpack.c.b16 %v202, %v201
      %219 = vmatprep.subr.bf16.mxu0 0
      %220 = vmatpush1.bf16.msra.mxu0 %v203
      %221 = vmatprep.subr.bf16.mxu0 0
      %222 = vmatpush1.bf16.msra.mxu0 %v204
      %223 = vmatprep.subr.bf16.mxu0 0
      %224 = vmatpush1.bf16.msra.mxu0 %v205
      %225 = vmatprep.subr.bf16.mxu0 0
      %226 = vmatpush1.bf16.msra.mxu0 %v206
      %227 = vmatprep.subr.bf16.mxu0 0
      %228 = vmatpush1.bf16.msra.mxu0 %v207
      %229 = vmatprep.subr.bf16.mxu0 0
      %230 = vmatpush1.bf16.msra.mxu0 %v208
      %231 = vmatprep.subr.bf16.mxu0 0
      %232 = vmatpush1.bf16.msra.mxu0 %v209
      %233 = vmatprep.subr.bf16.mxu0 0
      %234 = vmatpush1.bf16.msra.mxu0 %v210
      %235 = vmatprep.subr.bf16.mxu0 0
      %236 = vmatpush1.bf16.msra.mxu0 0
      %237 = vmatprep.subr.bf16.mxu0 0
      %238 = vmatpush1.bf16.msra.mxu0 0
      %239 = vmatprep.subr.bf16.mxu0 0
      %240 = vmatpush1.bf16.msra.mxu0 0
      %241 = vmatprep.subr.bf16.mxu0 0
      %242 = vmatpush1.bf16.msra.mxu0 0
      %243 = vmatprep.subr.bf16.mxu0 0
      %244 = vmatpush1.bf16.msra.mxu0 0
      %245 = vmatprep.subr.bf16.mxu0 0
      %246 = vmatpush1.bf16.msra.mxu0 0
      %247 = vmatprep.subr.bf16.mxu0 0
      %248 = vmatpush1.bf16.msra.mxu0 0
      %249 = vmatprep.subr.bf16.mxu0 0
      %250 = vmatpush1.bf16.msra.mxu0 0
      %251 = vmatprep.mubr.bf16.mxu0 0
      %252 = vmatmul.mubr.bf16.gmra.mrb[0].mxu0 %v155
      %v253 = vpop.f32.mrb[0].mxu0
      %v254 = vadd.f32 %v121, %v253
      %v255 = vpop.f32.mrb[0].mxu0
      %v256 = vpop.f32.mrb[0].mxu0
      %v257 = vadd.f32 %v121, %v256
      %v258 = vpop.f32.mrb[0].mxu0
      %259 = vmatprep.mubr.bf16.mxu0 0
      %260 = vmatmul.mubr.bf16.gmra.mrb[0].mxu0 %v156
      %v261 = vpop.f32.mrb[0].mxu0
      %v262 = vadd.f32 %v121, %v261
      %v263 = vpop.f32.mrb[0].mxu0
      %v264 = vpop.f32.mrb[0].mxu0
      %v265 = vadd.f32 %v121, %v264
      %v266 = vpop.f32.mrb[0].mxu0
      %267 = vmatprep.mubr.bf16.mxu0 0
      %268 = vmatmul.mubr.bf16.gmra.mrb[0].mxu0 %v157
      %v269 = vpop.f32.mrb[0].mxu0
      %v270 = vadd.f32 %v121, %v269
      %v271 = vpop.f32.mrb[0].mxu0
      %v272 = vpop.f32.mrb[0].mxu0
      %v273 = vadd.f32 %v121, %v272
      %v274 = vpop.f32.mrb[0].mxu0
      %275 = vmatprep.mubr.bf16.mxu0 0
      %276 = vmatmul.mubr.bf16.gmra.mrb[0].mxu0 %v158
      %v277 = vpop.f32.mrb[0].mxu0
      %v278 = vadd.f32 %v121, %v277
      %v279 = vpop.f32.mrb[0].mxu0
      %v280 = vpop.f32.mrb[0].mxu0
      %v281 = vadd.f32 %v121, %v280
      %v282 = vpop.f32.mrb[0].mxu0
      %283 = vmatprep.mubr.bf16.mxu0 0
      %284 = vmatmul.mubr.bf16.gmra.mrb[0].mxu0 %v159
      %v285 = vpop.f32.mrb[0].mxu0
      %v286 = vadd.f32 %v121, %v285
      %v287 = vpop.f32.mrb[0].mxu0
      %v288 = vpop.f32.mrb[0].mxu0
      %v289 = vadd.f32 %v121, %v288
      %v290 = vpop.f32.mrb[0].mxu0
      %291 = vmatprep.mubr.bf16.mxu0 0
      %292 = vmatmul.mubr.bf16.gmra.mrb[0].mxu0 %v160
      %v293 = vpop.f32.mrb[0].mxu0
      %v294 = vadd.f32 %v121, %v293
      %v295 = vpop.f32.mrb[0].mxu0
      %v296 = vpop.f32.mrb[0].mxu0
      %v297 = vadd.f32 %v121, %v296
      %v298 = vpop.f32.mrb[0].mxu0
      %299 = vmatprep.mubr.bf16.mxu0 0
      %300 = vmatmul.mubr.bf16.gmra.mrb[0].mxu0 %v161
      %v301 = vpop.f32.mrb[0].mxu0
      %v302 = vadd.f32 %v121, %v301
      %v303 = vpop.f32.mrb[0].mxu0
      %v304 = vpop.f32.mrb[0].mxu0
      %v305 = vadd.f32 %v121, %v304
      %v306 = vpop.f32.mrb[0].mxu0
      %307 = vmatprep.mubr.bf16.mxu0 0
      %308 = vmatmul.mubr.bf16.gmra.mrb[0].mxu0 %v162
      %v309 = vpop.f32.mrb[0].mxu0
      %v310 = vadd.f32 %v121, %v309
      %v311 = vpop.f32.mrb[0].mxu0
      %v312 = vpop.f32.mrb[0].mxu0
      %v313 = vadd.f32 %v121, %v312
      %v314 = vpop.f32.mrb[0].mxu0
      %315 = vdwg.mxu0
      %v316 = vld [vmem:[#allocation6] sm:$0xf]
      %v317 = vld [vmem:[#allocation6 + $0x4] sm:$0xf]
      %v318 = vld [vmem:[#allocation6 + $0x8] sm:$0xf]
      %v319 = vld [vmem:[#allocation6 + $0xc] sm:$0xf]
      %v320 = vld [vmem:[#allocation6 + $0x10] sm:$0xf]
      %v321 = vld [vmem:[#allocation6 + $0x14] sm:$0xf]
      %v322 = vld [vmem:[#allocation6 + $0x18] sm:$0xf]
      %v323 = vld [vmem:[#allocation6 + $0x1c] sm:$0xf]
      %v324 = vld [vmem:[#allocation6 + $0x20] sm:$0xf]
      %v325 = vld [vmem:[#allocation6 + $0x24] sm:$0xf]
      %v326 = vld [vmem:[#allocation6 + $0x28] sm:$0xf]
      %v327 = vld [vmem:[#allocation6 + $0x2c] sm:$0xf]
      %v328 = vld [vmem:[#allocation6 + $0x30] sm:$0xf]
      %v329 = vld [vmem:[#allocation6 + $0x34] sm:$0xf]
      %v330 = vld [vmem:[#allocation6 + $0x38] sm:$0xf]
      %v331 = vld [vmem:[#allocation6 + $0x3c] sm:$0xf]
      %v332 = vunpack.c.l.bf16 %v316
      %v333 = vunpack.c.l.bf16 %v317
      %v334 = vunpack.c.l.bf16 %v318
      %v335 = vunpack.c.l.bf16 %v319
      %v336 = vunpack.c.l.bf16 %v320
      %v337 = vunpack.c.l.bf16 %v321
      %v338 = vunpack.c.l.bf16 %v322
      %v339 = vunpack.c.l.bf16 %v323
      %v340 = vunpack.c.l.bf16 %v324
      %v341 = vunpack.c.l.bf16 %v325
      %v342 = vunpack.c.l.bf16 %v326
      %v343 = vunpack.c.l.bf16 %v327
      %v344 = vunpack.c.l.bf16 %v328
      %v345 = vunpack.c.l.bf16 %v329
      %v346 = vunpack.c.l.bf16 %v330
      %v347 = vunpack.c.l.bf16 %v331
      %v348 = vmul.f32 %v254, %v332
      %v349 = vmul.f32 %v257, %v333
      %v350 = vmul.f32 %v262, %v334
      %v351 = vmul.f32 %v265, %v335
      %v352 = vmul.f32 %v270, %v336
      %v353 = vmul.f32 %v273, %v337
      %v354 = vmul.f32 %v278, %v338
      %v355 = vmul.f32 %v281, %v339
      %v356 = vmul.f32 %v286, %v340
      %v357 = vmul.f32 %v289, %v341
      %v358 = vmul.f32 %v294, %v342
      %v359 = vmul.f32 %v297, %v343
      %v360 = vmul.f32 %v302, %v344
      %v361 = vmul.f32 %v305, %v345
      %v362 = vmul.f32 %v310, %v346
      %v363 = vmul.f32 %v313, %v347
      %v364 = vpack.c.bf16 %v349, %v348
      %v365 = vpack.c.bf16 %v351, %v350
      %v366 = vpack.c.bf16 %v353, %v352
      %v367 = vpack.c.bf16 %v355, %v354
      %v368 = vpack.c.bf16 %v357, %v356
      %v369 = vpack.c.bf16 %v359, %v358
      %v370 = vpack.c.bf16 %v361, %v360
      %v371 = vpack.c.bf16 %v363, %v362
      %372 = vst [vmem:[#allocation2] sm:$0xff] %v364
      %373 = vst [vmem:[#allocation2 + $0x8] sm:$0xff] %v365
      %374 = vst [vmem:[#allocation2 + $0x10] sm:$0xff] %v366
      %375 = vst [vmem:[#allocation2 + $0x18] sm:$0xff] %v367
      %376 = vst [vmem:[#allocation2 + $0x20] sm:$0xff] %v368
      %377 = vst [vmem:[#allocation2 + $0x28] sm:$0xff] %v369
      %378 = vst [vmem:[#allocation2 + $0x30] sm:$0xff] %v370
      %379 = vst [vmem:[#allocation2 + $0x38] sm:$0xff] %v371
      %380 = vst [vmem:[#allocation11] sm:$0xff] -inf
      %381 = vst [vmem:[#allocation11 + $0x8] sm:$0xff] -inf
      %382 = vst [vmem:[#allocation11 + $0x10] sm:$0xff] -inf
      %383 = vst [vmem:[#allocation11 + $0x18] sm:$0xff] -inf
      %384 = vst [vmem:[#allocation11 + $0x20] sm:$0xff] -inf
      %385 = vst [vmem:[#allocation11 + $0x28] sm:$0xff] -inf
      %386 = vst [vmem:[#allocation11 + $0x30] sm:$0xff] -inf
      %387 = vst [vmem:[#allocation11 + $0x38] sm:$0xff] -inf
      %388 = vst [vmem:[#allocation11 + $0x40] sm:$0xff] -inf
      %389 = vst [vmem:[#allocation11 + $0x48] sm:$0xff] -inf
      %390 = vst [vmem:[#allocation11 + $0x50] sm:$0xff] -inf
      %391 = vst [vmem:[#allocation11 + $0x58] sm:$0xff] -inf
      %392 = vst [vmem:[#allocation11 + $0x60] sm:$0xff] -inf
      %393 = vst [vmem:[#allocation11 + $0x68] sm:$0xff] -inf
      %394 = vst [vmem:[#allocation11 + $0x70] sm:$0xff] -inf
      %395 = vst [vmem:[#allocation11 + $0x78] sm:$0xff] -inf
      %396 = vst [vmem:[#allocation12] sm:$0xff] 0
      %397 = vst [vmem:[#allocation12 + $0x8] sm:$0xff] 0
      %398 = vst [vmem:[#allocation12 + $0x10] sm:$0xff] 0
      %399 = vst [vmem:[#allocation12 + $0x18] sm:$0xff] 0
      %400 = vst [vmem:[#allocation12 + $0x20] sm:$0xff] 0
      %401 = vst [vmem:[#allocation12 + $0x28] sm:$0xff] 0
      %402 = vst [vmem:[#allocation12 + $0x30] sm:$0xff] 0
      %403 = vst [vmem:[#allocation12 + $0x38] sm:$0xff] 0
      %404 = vst [vmem:[#allocation12 + $0x40] sm:$0xff] 0
      %405 = vst [vmem:[#allocation12 + $0x48] sm:$0xff] 0
      %406 = vst [vmem:[#allocation12 + $0x50] sm:$0xff] 0
      %407 = vst [vmem:[#allocation12 + $0x58] sm:$0xff] 0
      %408 = vst [vmem:[#allocation12 + $0x60] sm:$0xff] 0
      %409 = vst [vmem:[#allocation12 + $0x68] sm:$0xff] 0
      %410 = vst [vmem:[#allocation12 + $0x70] sm:$0xff] 0
      %411 = vst [vmem:[#allocation12 + $0x78] sm:$0xff] 0
    $region41: #{tpu_custom_call.1} parent=1 // pred_fallthru
      _
    %v412 = vld [vmem:[#allocation2] sm:$0xff]
    %v413 = vld [vmem:[#allocation2 + $0x8] sm:$0xff]
    %v414 = vld [vmem:[#allocation2 + $0x10] sm:$0xff]
    %v415 = vld [vmem:[#allocation2 + $0x18] sm:$0xff]
    %v416 = vld [vmem:[#allocation2 + $0x20] sm:$0xff]
    %v417 = vld [vmem:[#allocation2 + $0x28] sm:$0xff]
    %v418 = vld [vmem:[#allocation2 + $0x30] sm:$0xff]
    %v419 = vld [vmem:[#allocation2 + $0x38] sm:$0xff]
    %v420 = vld [vmem:[#allocation9] sm:$0xf]
    %v421 = vld [vmem:[#allocation9 + $0x4] sm:$0xf]
    %v422 = vld [vmem:[#allocation9 + $0x8] sm:$0xf]
    %v423 = vld [vmem:[#allocation9 + $0xc] sm:$0xf]
    %v424 = vld [vmem:[#allocation9 + $0x10] sm:$0xf]
    %v425 = vld [vmem:[#allocation9 + $0x14] sm:$0xf]
    %v426 = vld [vmem:[#allocation9 + $0x18] sm:$0xf]
    %v427 = vld [vmem:[#allocation9 + $0x1c] sm:$0xf]
    %v428 = vld [vmem:[#allocation9 + $0x20] sm:$0xf]
    %v429 = vld [vmem:[#allocation9 + $0x24] sm:$0xf]
    %v430 = vld [vmem:[#allocation9 + $0x28] sm:$0xf]
    %v431 = vld [vmem:[#allocation9 + $0x2c] sm:$0xf]
    %v432 = vld [vmem:[#allocation9 + $0x30] sm:$0xf]
    %v433 = vld [vmem:[#allocation9 + $0x34] sm:$0xf]
    %v434 = vld [vmem:[#allocation9 + $0x38] sm:$0xf]
    %v435 = vld [vmem:[#allocation9 + $0x3c] sm:$0xf]
    %v452 = vunpack.c.l.b16 %v420
    %v453 = vunpack.c.l.b16 %v421
    %v454 = vunpack.c.l.b16 %v422
    %v455 = vunpack.c.l.b16 %v423
    %v456 = vunpack.c.l.b16 %v424
    %v457 = vunpack.c.l.b16 %v425
    %v458 = vunpack.c.l.b16 %v426
    %v459 = vunpack.c.l.b16 %v427
    %v460 = vunpack.c.l.b16 %v428
    %v461 = vunpack.c.l.b16 %v429
    %v462 = vunpack.c.l.b16 %v430
    %v463 = vunpack.c.l.b16 %v431
    %v464 = vunpack.c.l.b16 %v432
    %v465 = vunpack.c.l.b16 %v433
    %v466 = vunpack.c.l.b16 %v434
    %v467 = vunpack.c.l.b16 %v435
    %v468 = vpack.c.b16 %v453, %v452
    %v469 = vpack.c.b16 %v455, %v454
    %v470 = vpack.c.b16 %v457, %v456
    %v471 = vpack.c.b16 %v459, %v458
    %v472 = vpack.c.b16 %v461, %v460
    %v473 = vpack.c.b16 %v463, %v462
    %v474 = vpack.c.b16 %v465, %v464
    %v475 = vpack.c.b16 %v467, %v466
    %484 = vmatprep.subr.bf16.mxu0 0
    %485 = vmatpush1.bf16.msra.mxu0 %v468
    %486 = vmatprep.subr.bf16.mxu0 0
    %487 = vmatpush1.bf16.msra.mxu0 %v469
    %488 = vmatprep.subr.bf16.mxu0 0
    %489 = vmatpush1.bf16.msra.mxu0 %v470
    %490 = vmatprep.subr.bf16.mxu0 0
    %491 = vmatpush1.bf16.msra.mxu0 %v471
    %492 = vmatprep.subr.bf16.mxu0 0
    %493 = vmatpush1.bf16.msra.mxu0 %v472
    %494 = vmatprep.subr.bf16.mxu0 0
    %495 = vmatpush1.bf16.msra.mxu0 %v473
    %496 = vmatprep.subr.bf16.mxu0 0
    %497 = vmatpush1.bf16.msra.mxu0 %v474
    %498 = vmatprep.subr.bf16.mxu0 0
    %499 = vmatpush1.bf16.msra.mxu0 %v475
    %500 = vmatprep.subr.bf16.mxu0 0
    %501 = vmatpush1.bf16.msra.mxu0 0
    %502 = vmatprep.subr.bf16.mxu0 0
    %503 = vmatpush1.bf16.msra.mxu0 0
    %504 = vmatprep.subr.bf16.mxu0 0
    %505 = vmatpush1.bf16.msra.mxu0 0
    %506 = vmatprep.subr.bf16.mxu0 0
    %507 = vmatpush1.bf16.msra.mxu0 0
    %508 = vmatprep.subr.bf16.mxu0 0
    %509 = vmatpush1.bf16.msra.mxu0 0
    %510 = vmatprep.subr.bf16.mxu0 0
    %511 = vmatpush1.bf16.msra.mxu0 0
    %512 = vmatprep.subr.bf16.mxu0 0
    %513 = vmatpush1.bf16.msra.mxu0 0
    %514 = vmatprep.subr.bf16.mxu0 0
    %515 = vmatpush1.bf16.msra.mxu0 0
    %516 = vmatprep.mubr.bf16.mxu0 0
    %517 = vmatmul.mubr.bf16.gmra.mrb[0].mxu0 %v412
    %v518 = vpop.f32.mrb[0].mxu0
    %v519 = vadd.f32 0.0, %v518
    %v520 = vpop.f32.mrb[0].mxu0
    %v521 = vpop.f32.mrb[0].mxu0
    %v522 = vadd.f32 0.0, %v521
    %v523 = vpop.f32.mrb[0].mxu0
    %524 = vmatprep.mubr.bf16.mxu0 0
    %525 = vmatmul.mubr.bf16.gmra.mrb[0].mxu0 %v413
    %v526 = vpop.f32.mrb[0].mxu0
    %v527 = vadd.f32 0.0, %v526
    %v528 = vpop.f32.mrb[0].mxu0
    %v529 = vpop.f32.mrb[0].mxu0
    %v530 = vadd.f32 0.0, %v529
    %v531 = vpop.f32.mrb[0].mxu0
    %532 = vmatprep.mubr.bf16.mxu0 0
    %533 = vmatmul.mubr.bf16.gmra.mrb[0].mxu0 %v414
    %v534 = vpop.f32.mrb[0].mxu0
    %v535 = vadd.f32 0.0, %v534
    %v536 = vpop.f32.mrb[0].mxu0
    %v537 = vpop.f32.mrb[0].mxu0
    %v538 = vadd.f32 0.0, %v537
    %v539 = vpop.f32.mrb[0].mxu0
    %540 = vmatprep.mubr.bf16.mxu0 0
    %541 = vmatmul.mubr.bf16.gmra.mrb[0].mxu0 %v415
    %v542 = vpop.f32.mrb[0].mxu0
    %v543 = vadd.f32 0.0, %v542
    %v544 = vpop.f32.mrb[0].mxu0
    %v545 = vpop.f32.mrb[0].mxu0
    %v546 = vadd.f32 0.0, %v545
    %v547 = vpop.f32.mrb[0].mxu0
    %548 = vmatprep.mubr.bf16.mxu0 0
    %549 = vmatmul.mubr.bf16.gmra.mrb[0].mxu0 %v416
    %v550 = vpop.f32.mrb[0].mxu0
    %v551 = vadd.f32 0.0, %v550
    %v552 = vpop.f32.mrb[0].mxu0
    %v553 = vpop.f32.mrb[0].mxu0
    %v554 = vadd.f32 0.0, %v553
    %v555 = vpop.f32.mrb[0].mxu0
    %556 = vmatprep.mubr.bf16.mxu0 0
    %557 = vmatmul.mubr.bf16.gmra.mrb[0].mxu0 %v417
    %v558 = vpop.f32.mrb[0].mxu0
    %v559 = vadd.f32 0.0, %v558
    %v560 = vpop.f32.mrb[0].mxu0
    %v561 = vpop.f32.mrb[0].mxu0
    %v562 = vadd.f32 0.0, %v561
    %v563 = vpop.f32.mrb[0].mxu0
    %564 = vmatprep.mubr.bf16.mxu0 0
    %565 = vmatmul.mubr.bf16.gmra.mrb[0].mxu0 %v418
    %v566 = vpop.f32.mrb[0].mxu0
    %v567 = vadd.f32 0.0, %v566
    %v568 = vpop.f32.mrb[0].mxu0
    %v569 = vpop.f32.mrb[0].mxu0
    %v570 = vadd.f32 0.0, %v569
    %v571 = vpop.f32.mrb[0].mxu0
    %572 = vmatprep.mubr.bf16.mxu0 0
    %573 = vmatmul.mubr.bf16.gmra.mrb[0].mxu0 %v419
    %v574 = vpop.f32.mrb[0].mxu0
    %v575 = vadd.f32 0.0, %v574
    %v576 = vpop.f32.mrb[0].mxu0
    %v577 = vpop.f32.mrb[0].mxu0
    %v578 = vadd.f32 0.0, %v577
    %v579 = vpop.f32.mrb[0].mxu0
    %580 = vdwg.mxu0
    %v581 = vlaneseq
    %v582 = vand.u32 %v581, 127
    %s583 = smul.u32 0, 128
    %v584 = vstv %s583
    %v585 = vadd.s32 %v582, %v584
    %v586 = vlaneseq
    %v587 = vshrl.u32 %v586, 7
    %v588 = vadd.s32 %v587, 8
    %v589 = vadd.s32 %v587, 16
    %v590 = vadd.s32 %v587, 24
    %v591 = vadd.s32 %v587, 32
    %v592 = vadd.s32 %v587, 40
    %v593 = vadd.s32 %v587, 48
    %v594 = vadd.s32 %v587, 56
    %v595 = vadd.s32 %v587, 64
    %v596 = vadd.s32 %v587, 72
    %v597 = vadd.s32 %v587, 80
    %v598 = vadd.s32 %v587, 88
    %v599 = vadd.s32 %v587, 96
    %v600 = vadd.s32 %v587, 104
    %v601 = vadd.s32 %v587, 112
    %v602 = vadd.s32 %v587, 120
    %s603 = smul.u32 0, 128
    %v604 = vstv %s603
    %v605 = vadd.s32 %v587, %v604
    %v606 = vadd.s32 %v588, %v604
    %v607 = vadd.s32 %v589, %v604
    %v608 = vadd.s32 %v590, %v604
    %v609 = vadd.s32 %v591, %v604
    %v610 = vadd.s32 %v592, %v604
    %v611 = vadd.s32 %v593, %v604
    %v612 = vadd.s32 %v594, %v604
    %v613 = vadd.s32 %v595, %v604
    %v614 = vadd.s32 %v596, %v604
    %v615 = vadd.s32 %v597, %v604
    %v616 = vadd.s32 %v598, %v604
    %v617 = vadd.s32 %v599, %v604
    %v618 = vadd.s32 %v600, %v604
    %v619 = vadd.s32 %v601, %v604
    %v620 = vadd.s32 %v602, %v604
    %vm621 = vcmp.gt.s32.totalorder %v605, %v585
    %vm622 = vcmp.gt.s32.totalorder %v606, %v585
    %vm623 = vcmp.gt.s32.totalorder %v607, %v585
    %vm624 = vcmp.gt.s32.totalorder %v608, %v585
    %vm625 = vcmp.gt.s32.totalorder %v609, %v585
    %vm626 = vcmp.gt.s32.totalorder %v610, %v585
    %vm627 = vcmp.gt.s32.totalorder %v611, %v585
    %vm628 = vcmp.gt.s32.totalorder %v612, %v585
    %vm629 = vcmp.gt.s32.totalorder %v613, %v585
    %vm630 = vcmp.gt.s32.totalorder %v614, %v585
    %vm631 = vcmp.gt.s32.totalorder %v615, %v585
    %vm632 = vcmp.gt.s32.totalorder %v616, %v585
    %vm633 = vcmp.gt.s32.totalorder %v617, %v585
    %vm634 = vcmp.gt.s32.totalorder %v618, %v585
    %vm635 = vcmp.gt.s32.totalorder %v619, %v585
    %vm636 = vcmp.gt.s32.totalorder %v620, %v585
    %v637 = vsel %vm621, %v519, -1e+30
    %v638 = vsel %vm622, %v522, -1e+30
    %v639 = vsel %vm623, %v527, -1e+30
    %v640 = vsel %vm624, %v530, -1e+30
    %v641 = vsel %vm625, %v535, -1e+30
    %v642 = vsel %vm626, %v538, -1e+30
    %v643 = vsel %vm627, %v543, -1e+30
    %v644 = vsel %vm628, %v546, -1e+30
    %v645 = vsel %vm629, %v551, -1e+30
    %v646 = vsel %vm630, %v554, -1e+30
    %v647 = vsel %vm631, %v559, -1e+30
    %v648 = vsel %vm632, %v562, -1e+30
    %v649 = vsel %vm633, %v567, -1e+30
    %v650 = vsel %vm634, %v570, -1e+30
    %v651 = vsel %vm635, %v575, -1e+30
    %v652 = vsel %vm636, %v578, -1e+30
    %v653 = vld [vmem:[#allocation11] sm:$0xff]
    %v654 = vld [vmem:[#allocation11 + $0x8] sm:$0xff]
    %v655 = vld [vmem:[#allocation11 + $0x10] sm:$0xff]
    %v656 = vld [vmem:[#allocation11 + $0x18] sm:$0xff]
    %v657 = vld [vmem:[#allocation11 + $0x20] sm:$0xff]
    %v658 = vld [vmem:[#allocation11 + $0x28] sm:$0xff]
    %v659 = vld [vmem:[#allocation11 + $0x30] sm:$0xff]
    %v660 = vld [vmem:[#allocation11 + $0x38] sm:$0xff]
    %v661 = vld [vmem:[#allocation11 + $0x40] sm:$0xff]
    %v662 = vld [vmem:[#allocation11 + $0x48] sm:$0xff]
    %v663 = vld [vmem:[#allocation11 + $0x50] sm:$0xff]
    %v664 = vld [vmem:[#allocation11 + $0x58] sm:$0xff]
    %v665 = vld [vmem:[#allocation11 + $0x60] sm:$0xff]
    %v666 = vld [vmem:[#allocation11 + $0x68] sm:$0xff]
    %v667 = vld [vmem:[#allocation11 + $0x70] sm:$0xff]
    %v668 = vld [vmem:[#allocation11 + $0x78] sm:$0xff]
    %v669 = vld [vmem:[#allocation12] sm:$0xff]
    %v670 = vld [vmem:[#allocation12 + $0x8] sm:$0xff]
    %v671 = vld [vmem:[#allocation12 + $0x10] sm:$0xff]
    %v672 = vld [vmem:[#allocation12 + $0x18] sm:$0xff]
    %v673 = vld [vmem:[#allocation12 + $0x20] sm:$0xff]
    %v674 = vld [vmem:[#allocation12 + $0x28] sm:$0xff]
    %v675 = vld [vmem:[#allocation12 + $0x30] sm:$0xff]
    %v676 = vld [vmem:[#allocation12 + $0x38] sm:$0xff]
    %v677 = vld [vmem:[#allocation12 + $0x40] sm:$0xff]
    %v678 = vld [vmem:[#allocation12 + $0x48] sm:$0xff]
    %v679 = vld [vmem:[#allocation12 + $0x50] sm:$0xff]
    %v680 = vld [vmem:[#allocation12 + $0x58] sm:$0xff]
    %v681 = vld [vmem:[#allocation12 + $0x60] sm:$0xff]
    %v682 = vld [vmem:[#allocation12 + $0x68] sm:$0xff]
    %v683 = vld [vmem:[#allocation12 + $0x70] sm:$0xff]
    %v684 = vld [vmem:[#allocation12 + $0x78] sm:$0xff]
    %v685 = vmax.f32 %v653, %v637
    %686 = vmax.xlane.f32.xlu0 %v685
    %v687 = vpop.xlane.xlu0 %686
    %v688 = vmax.f32 %v654, %v638
    %689 = vmax.xlane.f32.xlu0 %v688
    %v690 = vpop.xlane.xlu0 %689
    %v691 = vmax.f32 %v655, %v639
    %692 = vmax.xlane.f32.xlu0 %v691
    %v693 = vpop.xlane.xlu0 %692
    %v694 = vmax.f32 %v656, %v640
    %695 = vmax.xlane.f32.xlu0 %v694
    %v696 = vpop.xlane.xlu0 %695
    %v697 = vmax.f32 %v657, %v641
    %698 = vmax.xlane.f32.xlu0 %v697
    %v699 = vpop.xlane.xlu0 %698
    %v700 = vmax.f32 %v658, %v642
    %701 = vmax.xlane.f32.xlu0 %v700
    %v702 = vpop.xlane.xlu0 %701
    %v703 = vmax.f32 %v659, %v643
    %704 = vmax.xlane.f32.xlu0 %v703
    %v705 = vpop.xlane.xlu0 %704
    %v706 = vmax.f32 %v660, %v644
    %707 = vmax.xlane.f32.xlu0 %v706
    %v708 = vpop.xlane.xlu0 %707
    %v709 = vmax.f32 %v661, %v645
    %710 = vmax.xlane.f32.xlu0 %v709
    %v711 = vpop.xlane.xlu0 %710
    %v712 = vmax.f32 %v662, %v646
    %713 = vmax.xlane.f32.xlu0 %v712
    %v714 = vpop.xlane.xlu0 %713
    %v715 = vmax.f32 %v663, %v647
    %716 = vmax.xlane.f32.xlu0 %v715
    %v717 = vpop.xlane.xlu0 %716
    %v718 = vmax.f32 %v664, %v648
    %719 = vmax.xlane.f32.xlu0 %v718
    %v720 = vpop.xlane.xlu0 %719
    %v721 = vmax.f32 %v665, %v649
    %722 = vmax.xlane.f32.xlu0 %v721
    %v723 = vpop.xlane.xlu0 %722
    %v724 = vmax.f32 %v666, %v650
    %725 = vmax.xlane.f32.xlu0 %v724
    %v726 = vpop.xlane.xlu0 %725
    %v727 = vmax.f32 %v667, %v651
    %728 = vmax.xlane.f32.xlu0 %v727
    %v729 = vpop.xlane.xlu0 %728
    %v730 = vmax.f32 %v668, %v652
    %731 = vmax.xlane.f32.xlu0 %v730
    %v732 = vpop.xlane.xlu0 %731
    %vm733 = vcmp.eq.f32.partialorder %v653, %v687
    %vm734 = vcmp.eq.f32.partialorder %v637, %v687
    %vm735 = vcmp.eq.f32.partialorder %v654, %v690
    %vm736 = vcmp.eq.f32.partialorder %v638, %v690
    %vm737 = vcmp.eq.f32.partialorder %v655, %v693
    %vm738 = vcmp.eq.f32.partialorder %v639, %v693
    %vm739 = vcmp.eq.f32.partialorder %v656, %v696
    %vm740 = vcmp.eq.f32.partialorder %v640, %v696
    %vm741 = vcmp.eq.f32.partialorder %v657, %v699
    %vm742 = vcmp.eq.f32.partialorder %v641, %v699
    %vm743 = vcmp.eq.f32.partialorder %v658, %v702
    %vm744 = vcmp.eq.f32.partialorder %v642, %v702
    %vm745 = vcmp.eq.f32.partialorder %v659, %v705
    %vm746 = vcmp.eq.f32.partialorder %v643, %v705
    %vm747 = vcmp.eq.f32.partialorder %v660, %v708
    %vm748 = vcmp.eq.f32.partialorder %v644, %v708
    %vm749 = vcmp.eq.f32.partialorder %v661, %v711
    %vm750 = vcmp.eq.f32.partialorder %v645, %v711
    %vm751 = vcmp.eq.f32.partialorder %v662, %v714
    %vm752 = vcmp.eq.f32.partialorder %v646, %v714
    %vm753 = vcmp.eq.f32.partialorder %v663, %v717
    %vm754 = vcmp.eq.f32.partialorder %v647, %v717
    %vm755 = vcmp.eq.f32.partialorder %v664, %v720
    %vm756 = vcmp.eq.f32.partialorder %v648, %v720
    %vm757 = vcmp.eq.f32.partialorder %v665, %v723
    %vm758 = vcmp.eq.f32.partialorder %v649, %v723
    %vm759 = vcmp.eq.f32.partialorder %v666, %v726
    %vm760 = vcmp.eq.f32.partialorder %v650, %v726
    %vm761 = vcmp.eq.f32.partialorder %v667, %v729
    %vm762 = vcmp.eq.f32.partialorder %v651, %v729
    %vm763 = vcmp.eq.f32.partialorder %v668, %v732
    %vm764 = vcmp.eq.f32.partialorder %v652, %v732
    %v765 = vsel %vm733, %v669, 1073741824
    %v766 = vsel %vm734, %v585, 1073741824
    %v767 = vsel %vm735, %v670, 1073741824
    %v768 = vsel %vm736, %v585, 1073741824
    %v769 = vsel %vm737, %v671, 1073741824
    %v770 = vsel %vm738, %v585, 1073741824
    %v771 = vsel %vm739, %v672, 1073741824
    %v772 = vsel %vm740, %v585, 1073741824
    %v773 = vsel %vm741, %v673, 1073741824
    %v774 = vsel %vm742, %v585, 1073741824
    %v775 = vsel %vm743, %v674, 1073741824
    %v776 = vsel %vm744, %v585, 1073741824
    %v777 = vsel %vm745, %v675, 1073741824
    %v778 = vsel %vm746, %v585, 1073741824
    %v779 = vsel %vm747, %v676, 1073741824
    %v780 = vsel %vm748, %v585, 1073741824
    %v781 = vsel %vm749, %v677, 1073741824
    %v782 = vsel %vm750, %v585, 1073741824
    %v783 = vsel %vm751, %v678, 1073741824
    %v784 = vsel %vm752, %v585, 1073741824
    %v785 = vsel %vm753, %v679, 1073741824
    %v786 = vsel %vm754, %v585, 1073741824
    %v787 = vsel %vm755, %v680, 1073741824
    %v788 = vsel %vm756, %v585, 1073741824
    %v789 = vsel %vm757, %v681, 1073741824
    %v790 = vsel %vm758, %v585, 1073741824
    %v791 = vsel %vm759, %v682, 1073741824
    %v792 = vsel %vm760, %v585, 1073741824
    %v793 = vsel %vm761, %v683, 1073741824
    %v794 = vsel %vm762, %v585, 1073741824
    %v795 = vsel %vm763, %v684, 1073741824
    %v796 = vsel %vm764, %v585, 1073741824
    %vm797 = vcmp.lt.s32.totalorder %v765, %v766
    %v798 = vsel %vm797, %v765, %v766
    %v799 = vand.u32 %v798, 65535
    %v800 = vshra.s32 %v798, 16
    %v801 = vcvt.s32.f32 %v799
    %v802 = vcvt.s32.f32 %v800
    %803 = vmin.xlane.f32.xlu0 %v802
    %v804 = vpop.xlane.xlu0 %803
    %vm805 = vcmp.eq.f32.partialorder %v802, %v804
    %v806 = vsel %vm805, %v801, inf
    %807 = vmin.xlane.f32.xlu0 %v806
    %v808 = vpop.xlane.xlu0 %807
    %v809 = vcvt.f32.s32 %v808
    %v810 = vcvt.f32.s32 %v804
    %v811 = vshll.u32 %v810, 16
    %v812 = vadd.s32 %v811, %v809
    %vm813 = vcmp.lt.s32.totalorder %v767, %v768
    %v814 = vsel %vm813, %v767, %v768
    %v815 = vand.u32 %v814, 65535
    %v816 = vshra.s32 %v814, 16
    %v817 = vcvt.s32.f32 %v815
    %v818 = vcvt.s32.f32 %v816
    %819 = vmin.xlane.f32.xlu0 %v818
    %v820 = vpop.xlane.xlu0 %819
    %vm821 = vcmp.eq.f32.partialorder %v818, %v820
    %v822 = vsel %vm821, %v817, inf
    %823 = vmin.xlane.f32.xlu0 %v822
    %v824 = vpop.xlane.xlu0 %823
    %v825 = vcvt.f32.s32 %v824
    %v826 = vcvt.f32.s32 %v820
    %v827 = vshll.u32 %v826, 16
    %v828 = vadd.s32 %v827, %v825
    %vm829 = vcmp.lt.s32.totalorder %v769, %v770
    %v830 = vsel %vm829, %v769, %v770
    %v831 = vand.u32 %v830, 65535
    %v832 = vshra.s32 %v830, 16
    %v833 = vcvt.s32.f32 %v831
    %v834 = vcvt.s32.f32 %v832
    %835 = vmin.xlane.f32.xlu0 %v834
    %v836 = vpop.xlane.xlu0 %835
    %vm837 = vcmp.eq.f32.partialorder %v834, %v836
    %v838 = vsel %vm837, %v833, inf
    %839 = vmin.xlane.f32.xlu0 %v838
    %v840 = vpop.xlane.xlu0 %839
    %v841 = vcvt.f32.s32 %v840
    %v842 = vcvt.f32.s32 %v836
    %v843 = vshll.u32 %v842, 16
    %v844 = vadd.s32 %v843, %v841
    %vm845 = vcmp.lt.s32.totalorder %v771, %v772
    %v846 = vsel %vm845, %v771, %v772
    %v847 = vand.u32 %v846, 65535
    %v848 = vshra.s32 %v846, 16
    %v849 = vcvt.s32.f32 %v847
    %v850 = vcvt.s32.f32 %v848
    %851 = vmin.xlane.f32.xlu0 %v850
    %v852 = vpop.xlane.xlu0 %851
    %vm853 = vcmp.eq.f32.partialorder %v850, %v852
    %v854 = vsel %vm853, %v849, inf
    %855 = vmin.xlane.f32.xlu0 %v854
    %v856 = vpop.xlane.xlu0 %855
    %v857 = vcvt.f32.s32 %v856
    %v858 = vcvt.f32.s32 %v852
    %v859 = vshll.u32 %v858, 16
    %v860 = vadd.s32 %v859, %v857
    %vm861 = vcmp.lt.s32.totalorder %v773, %v774
    %v862 = vsel %vm861, %v773, %v774
    %v863 = vand.u32 %v862, 65535
    %v864 = vshra.s32 %v862, 16
    %v865 = vcvt.s32.f32 %v863
    %v866 = vcvt.s32.f32 %v864
    %867 = vmin.xlane.f32.xlu0 %v866
    %v868 = vpop.xlane.xlu0 %867
    %vm869 = vcmp.eq.f32.partialorder %v866, %v868
    %v870 = vsel %vm869, %v865, inf
    %871 = vmin.xlane.f32.xlu0 %v870
    %v872 = vpop.xlane.xlu0 %871
    %v873 = vcvt.f32.s32 %v872
    %v874 = vcvt.f32.s32 %v868
    %v875 = vshll.u32 %v874, 16
    %v876 = vadd.s32 %v875, %v873
    %vm877 = vcmp.lt.s32.totalorder %v775, %v776
    %v878 = vsel %vm877, %v775, %v776
    %v879 = vand.u32 %v878, 65535
    %v880 = vshra.s32 %v878, 16
    %v881 = vcvt.s32.f32 %v879
    %v882 = vcvt.s32.f32 %v880
    %883 = vmin.xlane.f32.xlu0 %v882
    %v884 = vpop.xlane.xlu0 %883
    %vm885 = vcmp.eq.f32.partialorder %v882, %v884
    %v886 = vsel %vm885, %v881, inf
    %887 = vmin.xlane.f32.xlu0 %v886
    %v888 = vpop.xlane.xlu0 %887
    %v889 = vcvt.f32.s32 %v888
    %v890 = vcvt.f32.s32 %v884
    %v891 = vshll.u32 %v890, 16
    %v892 = vadd.s32 %v891, %v889
    %vm893 = vcmp.lt.s32.totalorder %v777, %v778
    %v894 = vsel %vm893, %v777, %v778
    %v895 = vand.u32 %v894, 65535
    %v896 = vshra.s32 %v894, 16
    %v897 = vcvt.s32.f32 %v895
    %v898 = vcvt.s32.f32 %v896
    %899 = vmin.xlane.f32.xlu0 %v898
    %v900 = vpop.xlane.xlu0 %899
    %vm901 = vcmp.eq.f32.partialorder %v898, %v900
    %v902 = vsel %vm901, %v897, inf
    %903 = vmin.xlane.f32.xlu0 %v902
    %v904 = vpop.xlane.xlu0 %903
    %v905 = vcvt.f32.s32 %v904
    %v906 = vcvt.f32.s32 %v900
    %v907 = vshll.u32 %v906, 16
    %v908 = vadd.s32 %v907, %v905
    %vm909 = vcmp.lt.s32.totalorder %v779, %v780
    %v910 = vsel %vm909, %v779, %v780
    %v911 = vand.u32 %v910, 65535
    %v912 = vshra.s32 %v910, 16
    %v913 = vcvt.s32.f32 %v911
    %v914 = vcvt.s32.f32 %v912
    %915 = vmin.xlane.f32.xlu0 %v914
    %v916 = vpop.xlane.xlu0 %915
    %vm917 = vcmp.eq.f32.partialorder %v914, %v916
    %v918 = vsel %vm917, %v913, inf
    %919 = vmin.xlane.f32.xlu0 %v918
    %v920 = vpop.xlane.xlu0 %919
    %v921 = vcvt.f32.s32 %v920
    %v922 = vcvt.f32.s32 %v916
    %v923 = vshll.u32 %v922, 16
    %v924 = vadd.s32 %v923, %v921
    %vm925 = vcmp.lt.s32.totalorder %v781, %v782
    %v926 = vsel %vm925, %v781, %v782
    %v927 = vand.u32 %v926, 65535
    %v928 = vshra.s32 %v926, 16
    %v929 = vcvt.s32.f32 %v927
    %v930 = vcvt.s32.f32 %v928
    %931 = vmin.xlane.f32.xlu0 %v930
    %v932 = vpop.xlane.xlu0 %931
    %vm933 = vcmp.eq.f32.partialorder %v930, %v932
    %v934 = vsel %vm933, %v929, inf
    %935 = vmin.xlane.f32.xlu0 %v934
    %v936 = vpop.xlane.xlu0 %935
    %v937 = vcvt.f32.s32 %v936
    %v938 = vcvt.f32.s32 %v932
    %v939 = vshll.u32 %v938, 16
    %v940 = vadd.s32 %v939, %v937
    %vm941 = vcmp.lt.s32.totalorder %v783, %v784
    %v942 = vsel %vm941, %v783, %v784
    %v943 = vand.u32 %v942, 65535
    %v944 = vshra.s32 %v942, 16
    %v945 = vcvt.s32.f32 %v943
    %v946 = vcvt.s32.f32 %v944
    %947 = vmin.xlane.f32.xlu0 %v946
    %v948 = vpop.xlane.xlu0 %947
    %vm949 = vcmp.eq.f32.partialorder %v946, %v948
    %v950 = vsel %vm949, %v945, inf
    %951 = vmin.xlane.f32.xlu0 %v950
    %v952 = vpop.xlane.xlu0 %951
    %v953 = vcvt.f32.s32 %v952
    %v954 = vcvt.f32.s32 %v948
    %v955 = vshll.u32 %v954, 16
    %v956 = vadd.s32 %v955, %v953
    %vm957 = vcmp.lt.s32.totalorder %v785, %v786
    %v958 = vsel %vm957, %v785, %v786
    %v959 = vand.u32 %v958, 65535
    %v960 = vshra.s32 %v958, 16
    %v961 = vcvt.s32.f32 %v959
    %v962 = vcvt.s32.f32 %v960
    %963 = vmin.xlane.f32.xlu0 %v962
    %v964 = vpop.xlane.xlu0 %963
    %vm965 = vcmp.eq.f32.partialorder %v962, %v964
    %v966 = vsel %vm965, %v961, inf
    %967 = vmin.xlane.f32.xlu0 %v966
    %v968 = vpop.xlane.xlu0 %967
    %v969 = vcvt.f32.s32 %v968
    %v970 = vcvt.f32.s32 %v964
    %v971 = vshll.u32 %v970, 16
    %v972 = vadd.s32 %v971, %v969
    %vm973 = vcmp.lt.s32.totalorder %v787, %v788
    %v974 = vsel %vm973, %v787, %v788
    %v975 = vand.u32 %v974, 65535
    %v976 = vshra.s32 %v974, 16
    %v977 = vcvt.s32.f32 %v975
    %v978 = vcvt.s32.f32 %v976
    %979 = vmin.xlane.f32.xlu0 %v978
    %v980 = vpop.xlane.xlu0 %979
    %vm981 = vcmp.eq.f32.partialorder %v978, %v980
    %v982 = vsel %vm981, %v977, inf
    %983 = vmin.xlane.f32.xlu0 %v982
    %v984 = vpop.xlane.xlu0 %983
    %v985 = vcvt.f32.s32 %v984
    %v986 = vcvt.f32.s32 %v980
    %v987 = vshll.u32 %v986, 16
    %v988 = vadd.s32 %v987, %v985
    %vm989 = vcmp.lt.s32.totalorder %v789, %v790
    %v990 = vsel %vm989, %v789, %v790
    %v991 = vand.u32 %v990, 65535
    %v992 = vshra.s32 %v990, 16
    %v993 = vcvt.s32.f32 %v991
    %v994 = vcvt.s32.f32 %v992
    %995 = vmin.xlane.f32.xlu0 %v994
    %v996 = vpop.xlane.xlu0 %995
    %vm997 = vcmp.eq.f32.partialorder %v994, %v996
    %v998 = vsel %vm997, %v993, inf
    %999 = vmin.xlane.f32.xlu0 %v998
    %v1000 = vpop.xlane.xlu0 %999
    %v1001 = vcvt.f32.s32 %v1000
    %v1002 = vcvt.f32.s32 %v996
    %v1003 = vshll.u32 %v1002, 16
    %v1004 = vadd.s32 %v1003, %v1001
    %vm1005 = vcmp.lt.s32.totalorder %v791, %v792
    %v1006 = vsel %vm1005, %v791, %v792
    %v1007 = vand.u32 %v1006, 65535
    %v1008 = vshra.s32 %v1006, 16
    %v1009 = vcvt.s32.f32 %v1007
    %v1010 = vcvt.s32.f32 %v1008
    %1011 = vmin.xlane.f32.xlu0 %v1010
    %v1012 = vpop.xlane.xlu0 %1011
    %vm1013 = vcmp.eq.f32.partialorder %v1010, %v1012
    %v1014 = vsel %vm1013, %v1009, inf
    %1015 = vmin.xlane.f32.xlu0 %v1014
    %v1016 = vpop.xlane.xlu0 %1015
    %v1017 = vcvt.f32.s32 %v1016
    %v1018 = vcvt.f32.s32 %v1012
    %v1019 = vshll.u32 %v1018, 16
    %v1020 = vadd.s32 %v1019, %v1017
    %vm1021 = vcmp.lt.s32.totalorder %v793, %v794
    %v1022 = vsel %vm1021, %v793, %v794
    %v1023 = vand.u32 %v1022, 65535
    %v1024 = vshra.s32 %v1022, 16
    %v1025 = vcvt.s32.f32 %v1023
    %v1026 = vcvt.s32.f32 %v1024
    %1027 = vmin.xlane.f32.xlu0 %v1026
    %v1028 = vpop.xlane.xlu0 %1027
    %vm1029 = vcmp.eq.f32.partialorder %v1026, %v1028
    %v1030 = vsel %vm1029, %v1025, inf
    %1031 = vmin.xlane.f32.xlu0 %v1030
    %v1032 = vpop.xlane.xlu0 %1031
    %v1033 = vcvt.f32.s32 %v1032
    %v1034 = vcvt.f32.s32 %v1028
    %v1035 = vshll.u32 %v1034, 16
    %v1036 = vadd.s32 %v1035, %v1033
    %vm1037 = vcmp.lt.s32.totalorder %v795, %v796
    %v1038 = vsel %vm1037, %v795, %v796
    %v1039 = vand.u32 %v1038, 65535
    %v1040 = vshra.s32 %v1038, 16
    %v1041 = vcvt.s32.f32 %v1039
    %v1042 = vcvt.s32.f32 %v1040
    %1043 = vmin.xlane.f32.xlu0 %v1042
    %v1044 = vpop.xlane.xlu0 %1043
    %vm1045 = vcmp.eq.f32.partialorder %v1042, %v1044
    %v1046 = vsel %vm1045, %v1041, inf
    %1047 = vmin.xlane.f32.xlu0 %v1046
    %v1048 = vpop.xlane.xlu0 %1047
    %v1049 = vcvt.f32.s32 %v1048
    %v1050 = vcvt.f32.s32 %v1044
    %v1051 = vshll.u32 %v1050, 16
    %v1052 = vadd.s32 %v1051, %v1049
    %vm1053 = vcmask 7168
    %1054 = vst.msk [vmem:[#allocation11] sm:$0xff] %vm1053, %v687
    %1055 = vst.msk [vmem:[#allocation11 + $0x8] sm:$0xff] %vm1053, %v690
    %1056 = vst.msk [vmem:[#allocation11 + $0x10] sm:$0xff] %vm1053, %v693
    %1057 = vst.msk [vmem:[#allocation11 + $0x18] sm:$0xff] %vm1053, %v696
    %1058 = vst.msk [vmem:[#allocation11 + $0x20] sm:$0xff] %vm1053, %v699
    %1059 = vst.msk [vmem:[#allocation11 + $0x28] sm:$0xff] %vm1053, %v702
    %1060 = vst.msk [vmem:[#allocation11 + $0x30] sm:$0xff] %vm1053, %v705
    %1061 = vst.msk [vmem:[#allocation11 + $0x38] sm:$0xff] %vm1053, %v708
    %1062 = vst.msk [vmem:[#allocation11 + $0x40] sm:$0xff] %vm1053, %v711
    %1063 = vst.msk [vmem:[#allocation11 + $0x48] sm:$0xff] %vm1053, %v714
    %1064 = vst.msk [vmem:[#allocation11 + $0x50] sm:$0xff] %vm1053, %v717
    %1065 = vst.msk [vmem:[#allocation11 + $0x58] sm:$0xff] %vm1053, %v720
    %1066 = vst.msk [vmem:[#allocation11 + $0x60] sm:$0xff] %vm1053, %v723
    %1067 = vst.msk [vmem:[#allocation11 + $0x68] sm:$0xff] %vm1053, %v726
    %1068 = vst.msk [vmem:[#allocation11 + $0x70] sm:$0xff] %vm1053, %v729
    %1069 = vst.msk [vmem:[#allocation11 + $0x78] sm:$0xff] %vm1053, %v732
    %1070 = vst.msk [vmem:[#allocation12] sm:$0xff] %vm1053, %v812
    %1071 = vst.msk [vmem:[#allocation12 + $0x8] sm:$0xff] %vm1053, %v828
    %1072 = vst.msk [vmem:[#allocation12 + $0x10] sm:$0xff] %vm1053, %v844
    %1073 = vst.msk [vmem:[#allocation12 + $0x18] sm:$0xff] %vm1053, %v860
    %1074 = vst.msk [vmem:[#allocation12 + $0x20] sm:$0xff] %vm1053, %v876
    %1075 = vst.msk [vmem:[#allocation12 + $0x28] sm:$0xff] %vm1053, %v892
    %1076 = vst.msk [vmem:[#allocation12 + $0x30] sm:$0xff] %vm1053, %v908
    %1077 = vst.msk [vmem:[#allocation12 + $0x38] sm:$0xff] %vm1053, %v924
    %1078 = vst.msk [vmem:[#allocation12 + $0x40] sm:$0xff] %vm1053, %v940
    %1079 = vst.msk [vmem:[#allocation12 + $0x48] sm:$0xff] %vm1053, %v956
    %1080 = vst.msk [vmem:[#allocation12 + $0x50] sm:$0xff] %vm1053, %v972
    %1081 = vst.msk [vmem:[#allocation12 + $0x58] sm:$0xff] %vm1053, %v988
    %1082 = vst.msk [vmem:[#allocation12 + $0x60] sm:$0xff] %vm1053, %v1004
    %1083 = vst.msk [vmem:[#allocation12 + $0x68] sm:$0xff] %vm1053, %v1020
    %1084 = vst.msk [vmem:[#allocation12 + $0x70] sm:$0xff] %vm1053, %v1036
    %1085 = vst.msk [vmem:[#allocation12 + $0x78] sm:$0xff] %vm1053, %v1052
    %vm1086 = vcmp.eq.s32.totalorder %v669, %v812
    %vm1087 = vcmp.eq.s32.totalorder %v585, %v812
    %vm1088 = vcmp.eq.s32.totalorder %v670, %v828
    %vm1089 = vcmp.eq.s32.totalorder %v585, %v828
    %vm1090 = vcmp.eq.s32.totalorder %v671, %v844
    %vm1091 = vcmp.eq.s32.totalorder %v585, %v844
    %vm1092 = vcmp.eq.s32.totalorder %v672, %v860
    %vm1093 = vcmp.eq.s32.totalorder %v585, %v860
    %vm1094 = vcmp.eq.s32.totalorder %v673, %v876
    %vm1095 = vcmp.eq.s32.totalorder %v585, %v876
    %vm1096 = vcmp.eq.s32.totalorder %v674, %v892
    %vm1097 = vcmp.eq.s32.totalorder %v585, %v892
    %vm1098 = vcmp.eq.s32.totalorder %v675, %v908
    %vm1099 = vcmp.eq.s32.totalorder %v585, %v908
    %vm1100 = vcmp.eq.s32.totalorder %v676, %v924
    %vm1101 = vcmp.eq.s32.totalorder %v585, %v924
    %vm1102 = vcmp.eq.s32.totalorder %v677, %v940
    %vm1103 = vcmp.eq.s32.totalorder %v585, %v940
    %vm1104 = vcmp.eq.s32.totalorder %v678, %v956
    %vm1105 = vcmp.eq.s32.totalorder %v585, %v956
    %vm1106 = vcmp.eq.s32.totalorder %v679, %v972
    %vm1107 = vcmp.eq.s32.totalorder %v585, %v972
    %vm1108 = vcmp.eq.s32.totalorder %v680, %v988
    %vm1109 = vcmp.eq.s32.totalorder %v585, %v988
    %vm1110 = vcmp.eq.s32.totalorder %v681, %v1004
    %vm1111 = vcmp.eq.s32.totalorder %v585, %v1004
    %vm1112 = vcmp.eq.s32.totalorder %v682, %v1020
    %vm1113 = vcmp.eq.s32.totalorder %v585, %v1020
    %vm1114 = vcmp.eq.s32.totalorder %v683, %v1036
    %vm1115 = vcmp.eq.s32.totalorder %v585, %v1036
    %vm1116 = vcmp.eq.s32.totalorder %v684, %v1052
    %vm1117 = vcmp.eq.s32.totalorder %v585, %v1052
    %v1118 = vsel %vm1086, -inf, %v653
    %v1119 = vsel %vm1087, -inf, %v637
    %v1120 = vsel %vm1088, -inf, %v654
    %v1121 = vsel %vm1089, -inf, %v638
    %v1122 = vsel %vm1090, -inf, %v655
    %v1123 = vsel %vm1091, -inf, %v639
    %v1124 = vsel %vm1092, -inf, %v656
    %v1125 = vsel %vm1093, -inf, %v640
    %v1126 = vsel %vm1094, -inf, %v657
    %v1127 = vsel %vm1095, -inf, %v641
    %v1128 = vsel %vm1096, -inf, %v658
    %v1129 = vsel %vm1097, -inf, %v642
    %v1130 = vsel %vm1098, -inf, %v659
    %v1131 = vsel %vm1099, -inf, %v643
    %v1132 = vsel %vm1100, -inf, %v660
    %v1133 = vsel %vm1101, -inf, %v644
    %v1134 = vsel %vm1102, -inf, %v661
    %v1135 = vsel %vm1103, -inf, %v645
    %v1136 = vsel %vm1104, -inf, %v662
    %v1137 = vsel %vm1105, -inf, %v646
    %v1138 = vsel %vm1106, -inf, %v663
    %v1139 = vsel %vm1107, -inf, %v647
    %v1140 = vsel %vm1108, -inf, %v664
    %v1141 = vsel %vm1109, -inf, %v648
    %v1142 = vsel %vm1110, -inf, %v665
    %v1143 = vsel %vm1111, -inf, %v649
    %v1144 = vsel %vm1112, -inf, %v666
    %v1145 = vsel %vm1113, -inf, %v650
    %v1146 = vsel %vm1114, -inf, %v667
    %v1147 = vsel %vm1115, -inf, %v651
    %v1148 = vsel %vm1116, -inf, %v668
    %v1149 = vsel %vm1117, -inf, %v652
    %v1150 = vmax.f32 %v1118, %v1119
    %1151 = vmax.xlane.f32.xlu0 %v1150
    %v1152 = vpop.xlane.xlu0 %1151
    %v1153 = vmax.f32 %v1120, %v1121
    %1154 = vmax.xlane.f32.xlu0 %v1153
    %v1155 = vpop.xlane.xlu0 %1154
    %v1156 = vmax.f32 %v1122, %v1123
    %1157 = vmax.xlane.f32.xlu0 %v1156
    %v1158 = vpop.xlane.xlu0 %1157
    %v1159 = vmax.f32 %v1124, %v1125
    %1160 = vmax.xlane.f32.xlu0 %v1159
    %v1161 = vpop.xlane.xlu0 %1160
    %v1162 = vmax.f32 %v1126, %v1127
    %1163 = vmax.xlane.f32.xlu0 %v1162
    %v1164 = vpop.xlane.xlu0 %1163
    %v1165 = vmax.f32 %v1128, %v1129
    %1166 = vmax.xlane.f32.xlu0 %v1165
    %v1167 = vpop.xlane.xlu0 %1166
    %v1168 = vmax.f32 %v1130, %v1131
    %1169 = vmax.xlane.f32.xlu0 %v1168
    %v1170 = vpop.xlane.xlu0 %1169
    %v1171 = vmax.f32 %v1132, %v1133
    %1172 = vmax.xlane.f32.xlu0 %v1171
    %v1173 = vpop.xlane.xlu0 %1172
    %v1174 = vmax.f32 %v1134, %v1135
    %1175 = vmax.xlane.f32.xlu0 %v1174
    %v1176 = vpop.xlane.xlu0 %1175
    %v1177 = vmax.f32 %v1136, %v1137
    %1178 = vmax.xlane.f32.xlu0 %v1177
    %v1179 = vpop.xlane.xlu0 %1178
    %v1180 = vmax.f32 %v1138, %v1139
    %1181 = vmax.xlane.f32.xlu0 %v1180
    %v1182 = vpop.xlane.xlu0 %1181
    %v1183 = vmax.f32 %v1140, %v1141
    %1184 = vmax.xlane.f32.xlu0 %v1183
    %v1185 = vpop.xlane.xlu0 %1184
    %v1186 = vmax.f32 %v1142, %v1143
    %1187 = vmax.xlane.f32.xlu0 %v1186
    %v1188 = vpop.xlane.xlu0 %1187
    %v1189 = vmax.f32 %v1144, %v1145
    %1190 = vmax.xlane.f32.xlu0 %v1189
    %v1191 = vpop.xlane.xlu0 %1190
    %v1192 = vmax.f32 %v1146, %v1147
    %1193 = vmax.xlane.f32.xlu0 %v1192
    %v1194 = vpop.xlane.xlu0 %1193
    %v1195 = vmax.f32 %v1148, %v1149
    %1196 = vmax.xlane.f32.xlu0 %v1195
    %v1197 = vpop.xlane.xlu0 %1196
    %vm1198 = vcmp.eq.f32.partialorder %v1118, %v1152
    %vm1199 = vcmp.eq.f32.partialorder %v1119, %v1152
    %vm1200 = vcmp.eq.f32.partialorder %v1120, %v1155
    %vm1201 = vcmp.eq.f32.partialorder %v1121, %v1155
    %vm1202 = vcmp.eq.f32.partialorder %v1122, %v1158
    %vm1203 = vcmp.eq.f32.partialorder %v1123, %v1158
    %vm1204 = vcmp.eq.f32.partialorder %v1124, %v1161
    %vm1205 = vcmp.eq.f32.partialorder %v1125, %v1161
    %vm1206 = vcmp.eq.f32.partialorder %v1126, %v1164
    %vm1207 = vcmp.eq.f32.partialorder %v1127, %v1164
    %vm1208 = vcmp.eq.f32.partialorder %v1128, %v1167
    %vm1209 = vcmp.eq.f32.partialorder %v1129, %v1167
    %vm1210 = vcmp.eq.f32.partialorder %v1130, %v1170
    %vm1211 = vcmp.eq.f32.partialorder %v1131, %v1170
    %vm1212 = vcmp.eq.f32.partialorder %v1132, %v1173
    %vm1213 = vcmp.eq.f32.partialorder %v1133, %v1173
    %vm1214 = vcmp.eq.f32.partialorder %v1134, %v1176
    %vm1215 = vcmp.eq.f32.partialorder %v1135, %v1176
    %vm1216 = vcmp.eq.f32.partialorder %v1136, %v1179
    %vm1217 = vcmp.eq.f32.partialorder %v1137, %v1179
    %vm1218 = vcmp.eq.f32.partialorder %v1138, %v1182
    %vm1219 = vcmp.eq.f32.partialorder %v1139, %v1182
    %vm1220 = vcmp.eq.f32.partialorder %v1140, %v1185
    %vm1221 = vcmp.eq.f32.partialorder %v1141, %v1185
    %vm1222 = vcmp.eq.f32.partialorder %v1142, %v1188
    %vm1223 = vcmp.eq.f32.partialorder %v1143, %v1188
    %vm1224 = vcmp.eq.f32.partialorder %v1144, %v1191
    %vm1225 = vcmp.eq.f32.partialorder %v1145, %v1191
    %vm1226 = vcmp.eq.f32.partialorder %v1146, %v1194
    %vm1227 = vcmp.eq.f32.partialorder %v1147, %v1194
    %vm1228 = vcmp.eq.f32.partialorder %v1148, %v1197
    %vm1229 = vcmp.eq.f32.partialorder %v1149, %v1197
    %v1230 = vsel %vm1198, %v669, 1073741824
    %v1231 = vsel %vm1199, %v585, 1073741824
    %v1232 = vsel %vm1200, %v670, 1073741824
    %v1233 = vsel %vm1201, %v585, 1073741824
    %v1234 = vsel %vm1202, %v671, 1073741824
    %v1235 = vsel %vm1203, %v585, 1073741824
    %v1236 = vsel %vm1204, %v672, 1073741824
    %v1237 = vsel %vm1205, %v585, 1073741824
    %v1238 = vsel %vm1206, %v673, 1073741824
    %v1239 = vsel %vm1207, %v585, 1073741824
    %v1240 = vsel %vm1208, %v674, 1073741824
    %v1241 = vsel %vm1209, %v585, 1073741824
    %v1242 = vsel %vm1210, %v675, 1073741824
    %v1243 = vsel %vm1211, %v585, 1073741824
    %v1244 = vsel %vm1212, %v676, 1073741824
    %v1245 = vsel %vm1213, %v585, 1073741824
    %v1246 = vsel %vm1214, %v677, 1073741824
    %v1247 = vsel %vm1215, %v585, 1073741824
    %v1248 = vsel %vm1216, %v678, 1073741824
    %v1249 = vsel %vm1217, %v585, 1073741824
    %v1250 = vsel %vm1218, %v679, 1073741824
    %v1251 = vsel %vm1219, %v585, 1073741824
    %v1252 = vsel %vm1220, %v680, 1073741824
    %v1253 = vsel %vm1221, %v585, 1073741824
    %v1254 = vsel %vm1222, %v681, 1073741824
    %v1255 = vsel %vm1223, %v585, 1073741824
    %v1256 = vsel %vm1224, %v682, 1073741824
    %v1257 = vsel %vm1225, %v585, 1073741824
    %v1258 = vsel %vm1226, %v683, 1073741824
    %v1259 = vsel %vm1227, %v585, 1073741824
    %v1260 = vsel %vm1228, %v684, 1073741824
    %v1261 = vsel %vm1229, %v585, 1073741824
    %vm1262 = vcmp.lt.s32.totalorder %v1230, %v1231
    %v1263 = vsel %vm1262, %v1230, %v1231
    %v1264 = vand.u32 %v1263, 65535
    %v1265 = vshra.s32 %v1263, 16
    %v1266 = vcvt.s32.f32 %v1264
    %v1267 = vcvt.s32.f32 %v1265
    %1268 = vmin.xlane.f32.xlu0 %v1267
    %v1269 = vpop.xlane.xlu0 %1268
    %vm1270 = vcmp.eq.f32.partialorder %v1267, %v1269
    %v1271 = vsel %vm1270, %v1266, inf
    %1272 = vmin.xlane.f32.xlu0 %v1271
    %v1273 = vpop.xlane.xlu0 %1272
    %v1274 = vcvt.f32.s32 %v1273
    %v1275 = vcvt.f32.s32 %v1269
    %v1276 = vshll.u32 %v1275, 16
    %v1277 = vadd.s32 %v1276, %v1274
    %vm1278 = vcmp.lt.s32.totalorder %v1232, %v1233
    %v1279 = vsel %vm1278, %v1232, %v1233
    %v1280 = vand.u32 %v1279, 65535
    %v1281 = vshra.s32 %v1279, 16
    %v1282 = vcvt.s32.f32 %v1280
    %v1283 = vcvt.s32.f32 %v1281
    %1284 = vmin.xlane.f32.xlu0 %v1283
    %v1285 = vpop.xlane.xlu0 %1284
    %vm1286 = vcmp.eq.f32.partialorder %v1283, %v1285
    %v1287 = vsel %vm1286, %v1282, inf
    %1288 = vmin.xlane.f32.xlu0 %v1287
    %v1289 = vpop.xlane.xlu0 %1288
    %v1290 = vcvt.f32.s32 %v1289
    %v1291 = vcvt.f32.s32 %v1285
    %v1292 = vshll.u32 %v1291, 16
    %v1293 = vadd.s32 %v1292, %v1290
    %vm1294 = vcmp.lt.s32.totalorder %v1234, %v1235
    %v1295 = vsel %vm1294, %v1234, %v1235
    %v1296 = vand.u32 %v1295, 65535
    %v1297 = vshra.s32 %v1295, 16
    %v1298 = vcvt.s32.f32 %v1296
    %v1299 = vcvt.s32.f32 %v1297
    %1300 = vmin.xlane.f32.xlu0 %v1299
    %v1301 = vpop.xlane.xlu0 %1300
    %vm1302 = vcmp.eq.f32.partialorder %v1299, %v1301
    %v1303 = vsel %vm1302, %v1298, inf
    %1304 = vmin.xlane.f32.xlu0 %v1303
    %v1305 = vpop.xlane.xlu0 %1304
    %v1306 = vcvt.f32.s32 %v1305
    %v1307 = vcvt.f32.s32 %v1301
    %v1308 = vshll.u32 %v1307, 16
    %v1309 = vadd.s32 %v1308, %v1306
    %vm1310 = vcmp.lt.s32.totalorder %v1236, %v1237
    %v1311 = vsel %vm1310, %v1236, %v1237
    %v1312 = vand.u32 %v1311, 65535
    %v1313 = vshra.s32 %v1311, 16
    %v1314 = vcvt.s32.f32 %v1312
    %v1315 = vcvt.s32.f32 %v1313
    %1316 = vmin.xlane.f32.xlu0 %v1315
    %v1317 = vpop.xlane.xlu0 %1316
    %vm1318 = vcmp.eq.f32.partialorder %v1315, %v1317
    %v1319 = vsel %vm1318, %v1314, inf
    %1320 = vmin.xlane.f32.xlu0 %v1319
    %v1321 = vpop.xlane.xlu0 %1320
    %v1322 = vcvt.f32.s32 %v1321
    %v1323 = vcvt.f32.s32 %v1317
    %v1324 = vshll.u32 %v1323, 16
    %v1325 = vadd.s32 %v1324, %v1322
    %vm1326 = vcmp.lt.s32.totalorder %v1238, %v1239
    %v1327 = vsel %vm1326, %v1238, %v1239
    %v1328 = vand.u32 %v1327, 65535
    %v1329 = vshra.s32 %v1327, 16
    %v1330 = vcvt.s32.f32 %v1328
    %v1331 = vcvt.s32.f32 %v1329
    %1332 = vmin.xlane.f32.xlu0 %v1331
    %v1333 = vpop.xlane.xlu0 %1332
    %vm1334 = vcmp.eq.f32.partialorder %v1331, %v1333
    %v1335 = vsel %vm1334, %v1330, inf
    %1336 = vmin.xlane.f32.xlu0 %v1335
    %v1337 = vpop.xlane.xlu0 %1336
    %v1338 = vcvt.f32.s32 %v1337
    %v1339 = vcvt.f32.s32 %v1333
    %v1340 = vshll.u32 %v1339, 16
    %v1341 = vadd.s32 %v1340, %v1338
    %vm1342 = vcmp.lt.s32.totalorder %v1240, %v1241
    %v1343 = vsel %vm1342, %v1240, %v1241
    %v1344 = vand.u32 %v1343, 65535
    %v1345 = vshra.s32 %v1343, 16
    %v1346 = vcvt.s32.f32 %v1344
    %v1347 = vcvt.s32.f32 %v1345
    %1348 = vmin.xlane.f32.xlu0 %v1347
    %v1349 = vpop.xlane.xlu0 %1348
    %vm1350 = vcmp.eq.f32.partialorder %v1347, %v1349
    %v1351 = vsel %vm1350, %v1346, inf
    %1352 = vmin.xlane.f32.xlu0 %v1351
    %v1353 = vpop.xlane.xlu0 %1352
    %v1354 = vcvt.f32.s32 %v1353
    %v1355 = vcvt.f32.s32 %v1349
    %v1356 = vshll.u32 %v1355, 16
    %v1357 = vadd.s32 %v1356, %v1354
    %vm1358 = vcmp.lt.s32.totalorder %v1242, %v1243
    %v1359 = vsel %vm1358, %v1242, %v1243
    %v1360 = vand.u32 %v1359, 65535
    %v1361 = vshra.s32 %v1359, 16
    %v1362 = vcvt.s32.f32 %v1360
    %v1363 = vcvt.s32.f32 %v1361
    %1364 = vmin.xlane.f32.xlu0 %v1363
    %v1365 = vpop.xlane.xlu0 %1364
    %vm1366 = vcmp.eq.f32.partialorder %v1363, %v1365
    %v1367 = vsel %vm1366, %v1362, inf
    %1368 = vmin.xlane.f32.xlu0 %v1367
    %v1369 = vpop.xlane.xlu0 %1368
    %v1370 = vcvt.f32.s32 %v1369
    %v1371 = vcvt.f32.s32 %v1365
    %v1372 = vshll.u32 %v1371, 16
    %v1373 = vadd.s32 %v1372, %v1370
    %vm1374 = vcmp.lt.s32.totalorder %v1244, %v1245
    %v1375 = vsel %vm1374, %v1244, %v1245
    %v1376 = vand.u32 %v1375, 65535
    %v1377 = vshra.s32 %v1375, 16
    %v1378 = vcvt.s32.f32 %v1376
    %v1379 = vcvt.s32.f32 %v1377
    %1380 = vmin.xlane.f32.xlu0 %v1379
    %v1381 = vpop.xlane.xlu0 %1380
    %vm1382 = vcmp.eq.f32.partialorder %v1379, %v1381
    %v1383 = vsel %vm1382, %v1378, inf
    %1384 = vmin.xlane.f32.xlu0 %v1383
    %v1385 = vpop.xlane.xlu0 %1384
    %v1386 = vcvt.f32.s32 %v1385
    %v1387 = vcvt.f32.s32 %v1381
    %v1388 = vshll.u32 %v1387, 16
    %v1389 = vadd.s32 %v1388, %v1386
    %vm1390 = vcmp.lt.s32.totalorder %v1246, %v1247
    %v1391 = vsel %vm1390, %v1246, %v1247
    %v1392 = vand.u32 %v1391, 65535
    %v1393 = vshra.s32 %v1391, 16
    %v1394 = vcvt.s32.f32 %v1392
    %v1395 = vcvt.s32.f32 %v1393
    %1396 = vmin.xlane.f32.xlu0 %v1395
    %v1397 = vpop.xlane.xlu0 %1396
    %vm1398 = vcmp.eq.f32.partialorder %v1395, %v1397
    %v1399 = vsel %vm1398, %v1394, inf
    %1400 = vmin.xlane.f32.xlu0 %v1399
    %v1401 = vpop.xlane.xlu0 %1400
    %v1402 = vcvt.f32.s32 %v1401
    %v1403 = vcvt.f32.s32 %v1397
    %v1404 = vshll.u32 %v1403, 16
    %v1405 = vadd.s32 %v1404, %v1402
    %vm1406 = vcmp.lt.s32.totalorder %v1248, %v1249
    %v1407 = vsel %vm1406, %v1248, %v1249
    %v1408 = vand.u32 %v1407, 65535
    %v1409 = vshra.s32 %v1407, 16
    %v1410 = vcvt.s32.f32 %v1408
    %v1411 = vcvt.s32.f32 %v1409
    %1412 = vmin.xlane.f32.xlu0 %v1411
    %v1413 = vpop.xlane.xlu0 %1412
    %vm1414 = vcmp.eq.f32.partialorder %v1411, %v1413
    %v1415 = vsel %vm1414, %v1410, inf
    %1416 = vmin.xlane.f32.xlu0 %v1415
    %v1417 = vpop.xlane.xlu0 %1416
    %v1418 = vcvt.f32.s32 %v1417
    %v1419 = vcvt.f32.s32 %v1413
    %v1420 = vshll.u32 %v1419, 16
    %v1421 = vadd.s32 %v1420, %v1418
    %vm1422 = vcmp.lt.s32.totalorder %v1250, %v1251
    %v1423 = vsel %vm1422, %v1250, %v1251
    %v1424 = vand.u32 %v1423, 65535
    %v1425 = vshra.s32 %v1423, 16
    %v1426 = vcvt.s32.f32 %v1424
    %v1427 = vcvt.s32.f32 %v1425
    %1428 = vmin.xlane.f32.xlu0 %v1427
    %v1429 = vpop.xlane.xlu0 %1428
    %vm1430 = vcmp.eq.f32.partialorder %v1427, %v1429
    %v1431 = vsel %vm1430, %v1426, inf
    %1432 = vmin.xlane.f32.xlu0 %v1431
    %v1433 = vpop.xlane.xlu0 %1432
    %v1434 = vcvt.f32.s32 %v1433
    %v1435 = vcvt.f32.s32 %v1429
    %v1436 = vshll.u32 %v1435, 16
    %v1437 = vadd.s32 %v1436, %v1434
    %vm1438 = vcmp.lt.s32.totalorder %v1252, %v1253
    %v1439 = vsel %vm1438, %v1252, %v1253
    %v1440 = vand.u32 %v1439, 65535
    %v1441 = vshra.s32 %v1439, 16
    %v1442 = vcvt.s32.f32 %v1440
    %v1443 = vcvt.s32.f32 %v1441
    %1444 = vmin.xlane.f32.xlu0 %v1443
    %v1445 = vpop.xlane.xlu0 %1444
    %vm1446 = vcmp.eq.f32.partialorder %v1443, %v1445
    %v1447 = vsel %vm1446, %v1442, inf
    %1448 = vmin.xlane.f32.xlu0 %v1447
    %v1449 = vpop.xlane.xlu0 %1448
    %v1450 = vcvt.f32.s32 %v1449
    %v1451 = vcvt.f32.s32 %v1445
    %v1452 = vshll.u32 %v1451, 16
    %v1453 = vadd.s32 %v1452, %v1450
    %vm1454 = vcmp.lt.s32.totalorder %v1254, %v1255
    %v1455 = vsel %vm1454, %v1254, %v1255
    %v1456 = vand.u32 %v1455, 65535
    %v1457 = vshra.s32 %v1455, 16
    %v1458 = vcvt.s32.f32 %v1456
    %v1459 = vcvt.s32.f32 %v1457
    %1460 = vmin.xlane.f32.xlu0 %v1459
    %v1461 = vpop.xlane.xlu0 %1460
    %vm1462 = vcmp.eq.f32.partialorder %v1459, %v1461
    %v1463 = vsel %vm1462, %v1458, inf
    %1464 = vmin.xlane.f32.xlu0 %v1463
    %v1465 = vpop.xlane.xlu0 %1464
    %v1466 = vcvt.f32.s32 %v1465
    %v1467 = vcvt.f32.s32 %v1461
    %v1468 = vshll.u32 %v1467, 16
    %v1469 = vadd.s32 %v1468, %v1466
    %vm1470 = vcmp.lt.s32.totalorder %v1256, %v1257
    %v1471 = vsel %vm1470, %v1256, %v1257
    %v1472 = vand.u32 %v1471, 65535
    %v1473 = vshra.s32 %v1471, 16
    %v1474 = vcvt.s32.f32 %v1472
    %v1475 = vcvt.s32.f32 %v1473
    %1476 = vmin.xlane.f32.xlu0 %v1475
    %v1477 = vpop.xlane.xlu0 %1476
    %vm1478 = vcmp.eq.f32.partialorder %v1475, %v1477
    %v1479 = vsel %vm1478, %v1474, inf
    %1480 = vmin.xlane.f32.xlu0 %v1479
    %v1481 = vpop.xlane.xlu0 %1480
    %v1482 = vcvt.f32.s32 %v1481
    %v1483 = vcvt.f32.s32 %v1477
    %v1484 = vshll.u32 %v1483, 16
    %v1485 = vadd.s32 %v1484, %v1482
    %vm1486 = vcmp.lt.s32.totalorder %v1258, %v1259
    %v1487 = vsel %vm1486, %v1258, %v1259
    %v1488 = vand.u32 %v1487, 65535
    %v1489 = vshra.s32 %v1487, 16
    %v1490 = vcvt.s32.f32 %v1488
    %v1491 = vcvt.s32.f32 %v1489
    %1492 = vmin.xlane.f32.xlu0 %v1491
    %v1493 = vpop.xlane.xlu0 %1492
    %vm1494 = vcmp.eq.f32.partialorder %v1491, %v1493
    %v1495 = vsel %vm1494, %v1490, inf
    %1496 = vmin.xlane.f32.xlu0 %v1495
    %v1497 = vpop.xlane.xlu0 %1496
    %v1498 = vcvt.f32.s32 %v1497
    %v1499 = vcvt.f32.s32 %v1493
    %v1500 = vshll.u32 %v1499, 16
    %v1501 = vadd.s32 %v1500, %v1498
    %vm1502 = vcmp.lt.s32.totalorder %v1260, %v1261
    %v1503 = vsel %vm1502, %v1260, %v1261
    %v1504 = vand.u32 %v1503, 65535
    %v1505 = vshra.s32 %v1503, 16
    %v1506 = vcvt.s32.f32 %v1504
    %v1507 = vcvt.s32.f32 %v1505
    %1508 = vmin.xlane.f32.xlu0 %v1507
    %v1509 = vpop.xlane.xlu0 %1508
    %vm1510 = vcmp.eq.f32.partialorder %v1507, %v1509
    %v1511 = vsel %vm1510, %v1506, inf
    %1512 = vmin.xlane.f32.xlu0 %v1511
    %v1513 = vpop.xlane.xlu0 %1512
    %v1514 = vcvt.f32.s32 %v1513
    %v1515 = vcvt.f32.s32 %v1509
    %v1516 = vshll.u32 %v1515, 16
    %v1517 = vadd.s32 %v1516, %v1514
    %vm1518 = vcmask 15368
    %1519 = vst.msk [vmem:[#allocation11] sm:$0xff] %vm1518, %v1152
    %1520 = vst.msk [vmem:[#allocation11 + $0x8] sm:$0xff] %vm1518, %v1155
    %1521 = vst.msk [vmem:[#allocation11 + $0x10] sm:$0xff] %vm1518, %v1158
    %1522 = vst.msk [vmem:[#allocation11 + $0x18] sm:$0xff] %vm1518, %v1161
    %1523 = vst.msk [vmem:[#allocation11 + $0x20] sm:$0xff] %vm1518, %v1164
    %1524 = vst.msk [vmem:[#allocation11 + $0x28] sm:$0xff] %vm1518, %v1167
    %1525 = vst.msk [vmem:[#allocation11 + $0x30] sm:$0xff] %vm1518, %v1170
    %1526 = vst.msk [vmem:[#allocation11 + $0x38] sm:$0xff] %vm1518, %v1173
    %1527 = vst.msk [vmem:[#allocation11 + $0x40] sm:$0xff] %vm1518, %v1176
    %1528 = vst.msk [vmem:[#allocation11 + $0x48] sm:$0xff] %vm1518, %v1179
    %1529 = vst.msk [vmem:[#allocation11 + $0x50] sm:$0xff] %vm1518, %v1182
    %1530 = vst.msk [vmem:[#allocation11 + $0x58] sm:$0xff] %vm1518, %v1185
    %1531 = vst.msk [vmem:[#allocation11 + $0x60] sm:$0xff] %vm1518, %v1188
    %1532 = vst.msk [vmem:[#allocation11 + $0x68] sm:$0xff] %vm1518, %v1191
    %1533 = vst.msk [vmem:[#allocation11 + $0x70] sm:$0xff] %vm1518, %v1194
    %1534 = vst.msk [vmem:[#allocation11 + $0x78] sm:$0xff] %vm1518, %v1197
    %1535 = vst.msk [vmem:[#allocation12] sm:$0xff] %vm1518, %v1277
    %1536 = vst.msk [vmem:[#allocation12 + $0x8] sm:$0xff] %vm1518, %v1293
    %1537 = vst.msk [vmem:[#allocation12 + $0x10] sm:$0xff] %vm1518, %v1309
    %1538 = vst.msk [vmem:[#allocation12 + $0x18] sm:$0xff] %vm1518, %v1325
    %1539 = vst.msk [vmem:[#allocation12 + $0x20] sm:$0xff] %vm1518, %v1341
    %1540 = vst.msk [vmem:[#allocation12 + $0x28] sm:$0xff] %vm1518, %v1357
    %1541 = vst.msk [vmem:[#allocation12 + $0x30] sm:$0xff] %vm1518, %v1373
    %1542 = vst.msk [vmem:[#allocation12 + $0x38] sm:$0xff] %vm1518, %v1389
    %1543 = vst.msk [vmem:[#allocation12 + $0x40] sm:$0xff] %vm1518, %v1405
    %1544 = vst.msk [vmem:[#allocation12 + $0x48] sm:$0xff] %vm1518, %v1421
    %1545 = vst.msk [vmem:[#allocation12 + $0x50] sm:$0xff] %vm1518, %v1437
    %1546 = vst.msk [vmem:[#allocation12 + $0x58] sm:$0xff] %vm1518, %v1453
    %1547 = vst.msk [vmem:[#allocation12 + $0x60] sm:$0xff] %vm1518, %v1469
    %1548 = vst.msk [vmem:[#allocation12 + $0x68] sm:$0xff] %vm1518, %v1485
    %1549 = vst.msk [vmem:[#allocation12 + $0x70] sm:$0xff] %vm1518, %v1501
    %1550 = vst.msk [vmem:[#allocation12 + $0x78] sm:$0xff] %vm1518, %v1517
    %vm1551 = vcmp.eq.s32.totalorder %v669, %v1277
    %vm1552 = vcmp.eq.s32.totalorder %v585, %v1277
    %vm1553 = vcmp.eq.s32.totalorder %v670, %v1293
    %vm1554 = vcmp.eq.s32.totalorder %v585, %v1293
    %vm1555 = vcmp.eq.s32.totalorder %v671, %v1309
    %vm1556 = vcmp.eq.s32.totalorder %v585, %v1309
    %vm1557 = vcmp.eq.s32.totalorder %v672, %v1325
    %vm1558 = vcmp.eq.s32.totalorder %v585, %v1325
    %vm1559 = vcmp.eq.s32.totalorder %v673, %v1341
    %vm1560 = vcmp.eq.s32.totalorder %v585, %v1341
    %vm1561 = vcmp.eq.s32.totalorder %v674, %v1357
    %vm1562 = vcmp.eq.s32.totalorder %v585, %v1357
    %vm1563 = vcmp.eq.s32.totalorder %v675, %v1373
    %vm1564 = vcmp.eq.s32.totalorder %v585, %v1373
    %vm1565 = vcmp.eq.s32.totalorder %v676, %v1389
    %vm1566 = vcmp.eq.s32.totalorder %v585, %v1389
    %vm1567 = vcmp.eq.s32.totalorder %v677, %v1405
    %vm1568 = vcmp.eq.s32.totalorder %v585, %v1405
    %vm1569 = vcmp.eq.s32.totalorder %v678, %v1421
    %vm1570 = vcmp.eq.s32.totalorder %v585, %v1421
    %vm1571 = vcmp.eq.s32.totalorder %v679, %v1437
    %vm1572 = vcmp.eq.s32.totalorder %v585, %v1437
    %vm1573 = vcmp.eq.s32.totalorder %v680, %v1453
    %vm1574 = vcmp.eq.s32.totalorder %v585, %v1453
    %vm1575 = vcmp.eq.s32.totalorder %v681, %v1469
    %vm1576 = vcmp.eq.s32.totalorder %v585, %v1469
    %vm1577 = vcmp.eq.s32.totalorder %v682, %v1485
    %vm1578 = vcmp.eq.s32.totalorder %v585, %v1485
    %vm1579 = vcmp.eq.s32.totalorder %v683, %v1501
    %vm1580 = vcmp.eq.s32.totalorder %v585, %v1501
    %vm1581 = vcmp.eq.s32.totalorder %v684, %v1517
    %vm1582 = vcmp.eq.s32.totalorder %v585, %v1517
    %v1583 = vsel %vm1551, -inf, %v1118
    %v1584 = vsel %vm1552, -inf, %v1119
    %v1585 = vsel %vm1553, -inf, %v1120
    %v1586 = vsel %vm1554, -inf, %v1121
    %v1587 = vsel %vm1555, -inf, %v1122
    %v1588 = vsel %vm1556, -inf, %v1123
    %v1589 = vsel %vm1557, -inf, %v1124
    %v1590 = vsel %vm1558, -inf, %v1125
    %v1591 = vsel %vm1559, -inf, %v1126
    %v1592 = vsel %vm1560, -inf, %v1127
    %v1593 = vsel %vm1561, -inf, %v1128
    %v1594 = vsel %vm1562, -inf, %v1129
    %v1595 = vsel %vm1563, -inf, %v1130
    %v1596 = vsel %vm1564, -inf, %v1131
    %v1597 = vsel %vm1565, -inf, %v1132
    %v1598 = vsel %vm1566, -inf, %v1133
    %v1599 = vsel %vm1567, -inf, %v1134
    %v1600 = vsel %vm1568, -inf, %v1135
    %v1601 = vsel %vm1569, -inf, %v1136
    %v1602 = vsel %vm1570, -inf, %v1137
    %v1603 = vsel %vm1571, -inf, %v1138
    %v1604 = vsel %vm1572, -inf, %v1139
    %v1605 = vsel %vm1573, -inf, %v1140
    %v1606 = vsel %vm1574, -inf, %v1141
    %v1607 = vsel %vm1575, -inf, %v1142
    %v1608 = vsel %vm1576, -inf, %v1143
    %v1609 = vsel %vm1577, -inf, %v1144
    %v1610 = vsel %vm1578, -inf, %v1145
    %v1611 = vsel %vm1579, -inf, %v1146
    %v1612 = vsel %vm1580, -inf, %v1147
    %v1613 = vsel %vm1581, -inf, %v1148
    %v1614 = vsel %vm1582, -inf, %v1149
    %v1615 = vmax.f32 %v1583, %v1584
    %1616 = vmax.xlane.f32.xlu0 %v1615
    %v1617 = vpop.xlane.xlu0 %1616
    %v1618 = vmax.f32 %v1585, %v1586
    %1619 = vmax.xlane.f32.xlu0 %v1618
    %v1620 = vpop.xlane.xlu0 %1619
    %v1621 = vmax.f32 %v1587, %v1588
    %1622 = vmax.xlane.f32.xlu0 %v1621
    %v1623 = vpop.xlane.xlu0 %1622
    %v1624 = vmax.f32 %v1589, %v1590
    %1625 = vmax.xlane.f32.xlu0 %v1624
    %v1626 = vpop.xlane.xlu0 %1625
    %v1627 = vmax.f32 %v1591, %v1592
    %1628 = vmax.xlane.f32.xlu0 %v1627
    %v1629 = vpop.xlane.xlu0 %1628
    %v1630 = vmax.f32 %v1593, %v1594
    %1631 = vmax.xlane.f32.xlu0 %v1630
    %v1632 = vpop.xlane.xlu0 %1631
    %v1633 = vmax.f32 %v1595, %v1596
    %1634 = vmax.xlane.f32.xlu0 %v1633
    %v1635 = vpop.xlane.xlu0 %1634
    %v1636 = vmax.f32 %v1597, %v1598
    %1637 = vmax.xlane.f32.xlu0 %v1636
    %v1638 = vpop.xlane.xlu0 %1637
    %v1639 = vmax.f32 %v1599, %v1600
    %1640 = vmax.xlane.f32.xlu0 %v1639
    %v1641 = vpop.xlane.xlu0 %1640
    %v1642 = vmax.f32 %v1601, %v1602
    %1643 = vmax.xlane.f32.xlu0 %v1642
    %v1644 = vpop.xlane.xlu0 %1643
    %v1645 = vmax.f32 %v1603, %v1604
    %1646 = vmax.xlane.f32.xlu0 %v1645
    %v1647 = vpop.xlane.xlu0 %1646
    %v1648 = vmax.f32 %v1605, %v1606
    %1649 = vmax.xlane.f32.xlu0 %v1648
    %v1650 = vpop.xlane.xlu0 %1649
    %v1651 = vmax.f32 %v1607, %v1608
    %1652 = vmax.xlane.f32.xlu0 %v1651
    %v1653 = vpop.xlane.xlu0 %1652
    %v1654 = vmax.f32 %v1609, %v1610
    %1655 = vmax.xlane.f32.xlu0 %v1654
    %v1656 = vpop.xlane.xlu0 %1655
    %v1657 = vmax.f32 %v1611, %v1612
    %1658 = vmax.xlane.f32.xlu0 %v1657
    %v1659 = vpop.xlane.xlu0 %1658
    %v1660 = vmax.f32 %v1613, %v1614
    %1661 = vmax.xlane.f32.xlu0 %v1660
    %v1662 = vpop.xlane.xlu0 %1661
    %vm1663 = vcmp.eq.f32.partialorder %v1583, %v1617
    %vm1664 = vcmp.eq.f32.partialorder %v1584, %v1617
    %vm1665 = vcmp.eq.f32.partialorder %v1585, %v1620
    %vm1666 = vcmp.eq.f32.partialorder %v1586, %v1620
    %vm1667 = vcmp.eq.f32.partialorder %v1587, %v1623
    %vm1668 = vcmp.eq.f32.partialorder %v1588, %v1623
    %vm1669 = vcmp.eq.f32.partialorder %v1589, %v1626
    %vm1670 = vcmp.eq.f32.partialorder %v1590, %v1626
    %vm1671 = vcmp.eq.f32.partialorder %v1591, %v1629
    %vm1672 = vcmp.eq.f32.partialorder %v1592, %v1629
    %vm1673 = vcmp.eq.f32.partialorder %v1593, %v1632
    %vm1674 = vcmp.eq.f32.partialorder %v1594, %v1632
    %vm1675 = vcmp.eq.f32.partialorder %v1595, %v1635
    %vm1676 = vcmp.eq.f32.partialorder %v1596, %v1635
    %vm1677 = vcmp.eq.f32.partialorder %v1597, %v1638
    %vm1678 = vcmp.eq.f32.partialorder %v1598, %v1638
    %vm1679 = vcmp.eq.f32.partialorder %v1599, %v1641
    %vm1680 = vcmp.eq.f32.partialorder %v1600, %v1641
    %vm1681 = vcmp.eq.f32.partialorder %v1601, %v1644
    %vm1682 = vcmp.eq.f32.partialorder %v1602, %v1644
    %vm1683 = vcmp.eq.f32.partialorder %v1603, %v1647
    %vm1684 = vcmp.eq.f32.partialorder %v1604, %v1647
    %vm1685 = vcmp.eq.f32.partialorder %v1605, %v1650
    %vm1686 = vcmp.eq.f32.partialorder %v1606, %v1650
    %vm1687 = vcmp.eq.f32.partialorder %v1607, %v1653
    %vm1688 = vcmp.eq.f32.partialorder %v1608, %v1653
    %vm1689 = vcmp.eq.f32.partialorder %v1609, %v1656
    %vm1690 = vcmp.eq.f32.partialorder %v1610, %v1656
    %vm1691 = vcmp.eq.f32.partialorder %v1611, %v1659
    %vm1692 = vcmp.eq.f32.partialorder %v1612, %v1659
    %vm1693 = vcmp.eq.f32.partialorder %v1613, %v1662
    %vm1694 = vcmp.eq.f32.partialorder %v1614, %v1662
    %v1695 = vsel %vm1663, %v669, 1073741824
    %v1696 = vsel %vm1664, %v585, 1073741824
    %v1697 = vsel %vm1665, %v670, 1073741824
    %v1698 = vsel %vm1666, %v585, 1073741824
    %v1699 = vsel %vm1667, %v671, 1073741824
    %v1700 = vsel %vm1668, %v585, 1073741824
    %v1701 = vsel %vm1669, %v672, 1073741824
    %v1702 = vsel %vm1670, %v585, 1073741824
    %v1703 = vsel %vm1671, %v673, 1073741824
    %v1704 = vsel %vm1672, %v585, 1073741824
    %v1705 = vsel %vm1673, %v674, 1073741824
    %v1706 = vsel %vm1674, %v585, 1073741824
    %v1707 = vsel %vm1675, %v675, 1073741824
    %v1708 = vsel %vm1676, %v585, 1073741824
    %v1709 = vsel %vm1677, %v676, 1073741824
    %v1710 = vsel %vm1678, %v585, 1073741824
    %v1711 = vsel %vm1679, %v677, 1073741824
    %v1712 = vsel %vm1680, %v585, 1073741824
    %v1713 = vsel %vm1681, %v678, 1073741824
    %v1714 = vsel %vm1682, %v585, 1073741824
    %v1715 = vsel %vm1683, %v679, 1073741824
    %v1716 = vsel %vm1684, %v585, 1073741824
    %v1717 = vsel %vm1685, %v680, 1073741824
    %v1718 = vsel %vm1686, %v585, 1073741824
    %v1719 = vsel %vm1687, %v681, 1073741824
    %v1720 = vsel %vm1688, %v585, 1073741824
    %v1721 = vsel %vm1689, %v682, 1073741824
    %v1722 = vsel %vm1690, %v585, 1073741824
    %v1723 = vsel %vm1691, %v683, 1073741824
    %v1724 = vsel %vm1692, %v585, 1073741824
    %v1725 = vsel %vm1693, %v684, 1073741824
    %v1726 = vsel %vm1694, %v585, 1073741824
    %vm1727 = vcmp.lt.s32.totalorder %v1695, %v1696
    %v1728 = vsel %vm1727, %v1695, %v1696
    %v1729 = vand.u32 %v1728, 65535
    %v1730 = vshra.s32 %v1728, 16
    %v1731 = vcvt.s32.f32 %v1729
    %v1732 = vcvt.s32.f32 %v1730
    %1733 = vmin.xlane.f32.xlu0 %v1732
    %v1734 = vpop.xlane.xlu0 %1733
    %vm1735 = vcmp.eq.f32.partialorder %v1732, %v1734
    %v1736 = vsel %vm1735, %v1731, inf
    %1737 = vmin.xlane.f32.xlu0 %v1736
    %v1738 = vpop.xlane.xlu0 %1737
    %v1739 = vcvt.f32.s32 %v1738
    %v1740 = vcvt.f32.s32 %v1734
    %v1741 = vshll.u32 %v1740, 16
    %v1742 = vadd.s32 %v1741, %v1739
    %vm1743 = vcmp.lt.s32.totalorder %v1697, %v1698
    %v1744 = vsel %vm1743, %v1697, %v1698
    %v1745 = vand.u32 %v1744, 65535
    %v1746 = vshra.s32 %v1744, 16
    %v1747 = vcvt.s32.f32 %v1745
    %v1748 = vcvt.s32.f32 %v1746
    %1749 = vmin.xlane.f32.xlu0 %v1748
    %v1750 = vpop.xlane.xlu0 %1749
    %vm1751 = vcmp.eq.f32.partialorder %v1748, %v1750
    %v1752 = vsel %vm1751, %v1747, inf
    %1753 = vmin.xlane.f32.xlu0 %v1752
    %v1754 = vpop.xlane.xlu0 %1753
    %v1755 = vcvt.f32.s32 %v1754
    %v1756 = vcvt.f32.s32 %v1750
    %v1757 = vshll.u32 %v1756, 16
    %v1758 = vadd.s32 %v1757, %v1755
    %vm1759 = vcmp.lt.s32.totalorder %v1699, %v1700
    %v1760 = vsel %vm1759, %v1699, %v1700
    %v1761 = vand.u32 %v1760, 65535
    %v1762 = vshra.s32 %v1760, 16
    %v1763 = vcvt.s32.f32 %v1761
    %v1764 = vcvt.s32.f32 %v1762
    %1765 = vmin.xlane.f32.xlu0 %v1764
    %v1766 = vpop.xlane.xlu0 %1765
    %vm1767 = vcmp.eq.f32.partialorder %v1764, %v1766
    %v1768 = vsel %vm1767, %v1763, inf
    %1769 = vmin.xlane.f32.xlu0 %v1768
    %v1770 = vpop.xlane.xlu0 %1769
    %v1771 = vcvt.f32.s32 %v1770
    %v1772 = vcvt.f32.s32 %v1766
    %v1773 = vshll.u32 %v1772, 16
    %v1774 = vadd.s32 %v1773, %v1771
    %vm1775 = vcmp.lt.s32.totalorder %v1701, %v1702
    %v1776 = vsel %vm1775, %v1701, %v1702
    %v1777 = vand.u32 %v1776, 65535
    %v1778 = vshra.s32 %v1776, 16
    %v1779 = vcvt.s32.f32 %v1777
    %v1780 = vcvt.s32.f32 %v1778
    %1781 = vmin.xlane.f32.xlu0 %v1780
    %v1782 = vpop.xlane.xlu0 %1781
    %vm1783 = vcmp.eq.f32.partialorder %v1780, %v1782
    %v1784 = vsel %vm1783, %v1779, inf
    %1785 = vmin.xlane.f32.xlu0 %v1784
    %v1786 = vpop.xlane.xlu0 %1785
    %v1787 = vcvt.f32.s32 %v1786
    %v1788 = vcvt.f32.s32 %v1782
    %v1789 = vshll.u32 %v1788, 16
    %v1790 = vadd.s32 %v1789, %v1787
    %vm1791 = vcmp.lt.s32.totalorder %v1703, %v1704
    %v1792 = vsel %vm1791, %v1703, %v1704
    %v1793 = vand.u32 %v1792, 65535
    %v1794 = vshra.s32 %v1792, 16
    %v1795 = vcvt.s32.f32 %v1793
    %v1796 = vcvt.s32.f32 %v1794
    %1797 = vmin.xlane.f32.xlu0 %v1796
    %v1798 = vpop.xlane.xlu0 %1797
    %vm1799 = vcmp.eq.f32.partialorder %v1796, %v1798
    %v1800 = vsel %vm1799, %v1795, inf
    %1801 = vmin.xlane.f32.xlu0 %v1800
    %v1802 = vpop.xlane.xlu0 %1801
    %v1803 = vcvt.f32.s32 %v1802
    %v1804 = vcvt.f32.s32 %v1798
    %v1805 = vshll.u32 %v1804, 16
    %v1806 = vadd.s32 %v1805, %v1803
    %vm1807 = vcmp.lt.s32.totalorder %v1705, %v1706
    %v1808 = vsel %vm1807, %v1705, %v1706
    %v1809 = vand.u32 %v1808, 65535
    %v1810 = vshra.s32 %v1808, 16
    %v1811 = vcvt.s32.f32 %v1809
    %v1812 = vcvt.s32.f32 %v1810
    %1813 = vmin.xlane.f32.xlu0 %v1812
    %v1814 = vpop.xlane.xlu0 %1813
    %vm1815 = vcmp.eq.f32.partialorder %v1812, %v1814
    %v1816 = vsel %vm1815, %v1811, inf
    %1817 = vmin.xlane.f32.xlu0 %v1816
    %v1818 = vpop.xlane.xlu0 %1817
    %v1819 = vcvt.f32.s32 %v1818
    %v1820 = vcvt.f32.s32 %v1814
    %v1821 = vshll.u32 %v1820, 16
    %v1822 = vadd.s32 %v1821, %v1819
    %vm1823 = vcmp.lt.s32.totalorder %v1707, %v1708
    %v1824 = vsel %vm1823, %v1707, %v1708
    %v1825 = vand.u32 %v1824, 65535
    %v1826 = vshra.s32 %v1824, 16
    %v1827 = vcvt.s32.f32 %v1825
    %v1828 = vcvt.s32.f32 %v1826
    %1829 = vmin.xlane.f32.xlu0 %v1828
    %v1830 = vpop.xlane.xlu0 %1829
    %vm1831 = vcmp.eq.f32.partialorder %v1828, %v1830
    %v1832 = vsel %vm1831, %v1827, inf
    %1833 = vmin.xlane.f32.xlu0 %v1832
    %v1834 = vpop.xlane.xlu0 %1833
    %v1835 = vcvt.f32.s32 %v1834
    %v1836 = vcvt.f32.s32 %v1830
    %v1837 = vshll.u32 %v1836, 16
    %v1838 = vadd.s32 %v1837, %v1835
    %vm1839 = vcmp.lt.s32.totalorder %v1709, %v1710
    %v1840 = vsel %vm1839, %v1709, %v1710
    %v1841 = vand.u32 %v1840, 65535
    %v1842 = vshra.s32 %v1840, 16
    %v1843 = vcvt.s32.f32 %v1841
    %v1844 = vcvt.s32.f32 %v1842
    %1845 = vmin.xlane.f32.xlu0 %v1844
    %v1846 = vpop.xlane.xlu0 %1845
    %vm1847 = vcmp.eq.f32.partialorder %v1844, %v1846
    %v1848 = vsel %vm1847, %v1843, inf
    %1849 = vmin.xlane.f32.xlu0 %v1848
    %v1850 = vpop.xlane.xlu0 %1849
    %v1851 = vcvt.f32.s32 %v1850
    %v1852 = vcvt.f32.s32 %v1846
    %v1853 = vshll.u32 %v1852, 16
    %v1854 = vadd.s32 %v1853, %v1851
    %vm1855 = vcmp.lt.s32.totalorder %v1711, %v1712
    %v1856 = vsel %vm1855, %v1711, %v1712
    %v1857 = vand.u32 %v1856, 65535
    %v1858 = vshra.s32 %v1856, 16
    %v1859 = vcvt.s32.f32 %v1857
    %v1860 = vcvt.s32.f32 %v1858
    %1861 = vmin.xlane.f32.xlu0 %v1860
    %v1862 = vpop.xlane.xlu0 %1861
    %vm1863 = vcmp.eq.f32.partialorder %v1860, %v1862
    %v1864 = vsel %vm1863, %v1859, inf
    %1865 = vmin.xlane.f32.xlu0 %v1864
    %v1866 = vpop.xlane.xlu0 %1865
    %v1867 = vcvt.f32.s32 %v1866
    %v1868 = vcvt.f32.s32 %v1862
    %v1869 = vshll.u32 %v1868, 16
    %v1870 = vadd.s32 %v1869, %v1867
    %vm1871 = vcmp.lt.s32.totalorder %v1713, %v1714
    %v1872 = vsel %vm1871, %v1713, %v1714
    %v1873 = vand.u32 %v1872, 65535
    %v1874 = vshra.s32 %v1872, 16
    %v1875 = vcvt.s32.f32 %v1873
    %v1876 = vcvt.s32.f32 %v1874
    %1877 = vmin.xlane.f32.xlu0 %v1876
    %v1878 = vpop.xlane.xlu0 %1877
    %vm1879 = vcmp.eq.f32.partialorder %v1876, %v1878
    %v1880 = vsel %vm1879, %v1875, inf
    %1881 = vmin.xlane.f32.xlu0 %v1880
    %v1882 = vpop.xlane.xlu0 %1881
    %v1883 = vcvt.f32.s32 %v1882
    %v1884 = vcvt.f32.s32 %v1878
    %v1885 = vshll.u32 %v1884, 16
    %v1886 = vadd.s32 %v1885, %v1883
    %vm1887 = vcmp.lt.s32.totalorder %v1715, %v1716
    %v1888 = vsel %vm1887, %v1715, %v1716
    %v1889 = vand.u32 %v1888, 65535
    %v1890 = vshra.s32 %v1888, 16
    %v1891 = vcvt.s32.f32 %v1889
    %v1892 = vcvt.s32.f32 %v1890
    %1893 = vmin.xlane.f32.xlu0 %v1892
    %v1894 = vpop.xlane.xlu0 %1893
    %vm1895 = vcmp.eq.f32.partialorder %v1892, %v1894
    %v1896 = vsel %vm1895, %v1891, inf
    %1897 = vmin.xlane.f32.xlu0 %v1896
    %v1898 = vpop.xlane.xlu0 %1897
    %v1899 = vcvt.f32.s32 %v1898
    %v1900 = vcvt.f32.s32 %v1894
    %v1901 = vshll.u32 %v1900, 16
    %v1902 = vadd.s32 %v1901, %v1899
    %vm1903 = vcmp.lt.s32.totalorder %v1717, %v1718
    %v1904 = vsel %vm1903, %v1717, %v1718
    %v1905 = vand.u32 %v1904, 65535
    %v1906 = vshra.s32 %v1904, 16
    %v1907 = vcvt.s32.f32 %v1905
    %v1908 = vcvt.s32.f32 %v1906
    %1909 = vmin.xlane.f32.xlu0 %v1908
    %v1910 = vpop.xlane.xlu0 %1909
    %vm1911 = vcmp.eq.f32.partialorder %v1908, %v1910
    %v1912 = vsel %vm1911, %v1907, inf
    %1913 = vmin.xlane.f32.xlu0 %v1912
    %v1914 = vpop.xlane.xlu0 %1913
    %v1915 = vcvt.f32.s32 %v1914
    %v1916 = vcvt.f32.s32 %v1910
    %v1917 = vshll.u32 %v1916, 16
    %v1918 = vadd.s32 %v1917, %v1915
    %vm1919 = vcmp.lt.s32.totalorder %v1719, %v1720
    %v1920 = vsel %vm1919, %v1719, %v1720
    %v1921 = vand.u32 %v1920, 65535
    %v1922 = vshra.s32 %v1920, 16
    %v1923 = vcvt.s32.f32 %v1921
    %v1924 = vcvt.s32.f32 %v1922
    %1925 = vmin.xlane.f32.xlu0 %v1924
    %v1926 = vpop.xlane.xlu0 %1925
    %vm1927 = vcmp.eq.f32.partialorder %v1924, %v1926
    %v1928 = vsel %vm1927, %v1923, inf
    %1929 = vmin.xlane.f32.xlu0 %v1928
    %v1930 = vpop.xlane.xlu0 %1929
    %v1931 = vcvt.f32.s32 %v1930
    %v1932 = vcvt.f32.s32 %v1926
    %v1933 = vshll.u32 %v1932, 16
    %v1934 = vadd.s32 %v1933, %v1931
    %vm1935 = vcmp.lt.s32.totalorder %v1721, %v1722
    %v1936 = vsel %vm1935, %v1721, %v1722
    %v1937 = vand.u32 %v1936, 65535
    %v1938 = vshra.s32 %v1936, 16
    %v1939 = vcvt.s32.f32 %v1937
    %v1940 = vcvt.s32.f32 %v1938
    %1941 = vmin.xlane.f32.xlu0 %v1940
    %v1942 = vpop.xlane.xlu0 %1941
    %vm1943 = vcmp.eq.f32.partialorder %v1940, %v1942
    %v1944 = vsel %vm1943, %v1939, inf
    %1945 = vmin.xlane.f32.xlu0 %v1944
    %v1946 = vpop.xlane.xlu0 %1945
    %v1947 = vcvt.f32.s32 %v1946
    %v1948 = vcvt.f32.s32 %v1942
    %v1949 = vshll.u32 %v1948, 16
    %v1950 = vadd.s32 %v1949, %v1947
    %vm1951 = vcmp.lt.s32.totalorder %v1723, %v1724
    %v1952 = vsel %vm1951, %v1723, %v1724
    %v1953 = vand.u32 %v1952, 65535
    %v1954 = vshra.s32 %v1952, 16
    %v1955 = vcvt.s32.f32 %v1953
    %v1956 = vcvt.s32.f32 %v1954
    %1957 = vmin.xlane.f32.xlu0 %v1956
    %v1958 = vpop.xlane.xlu0 %1957
    %vm1959 = vcmp.eq.f32.partialorder %v1956, %v1958
    %v1960 = vsel %vm1959, %v1955, inf
    %1961 = vmin.xlane.f32.xlu0 %v1960
    %v1962 = vpop.xlane.xlu0 %1961
    %v1963 = vcvt.f32.s32 %v1962
    %v1964 = vcvt.f32.s32 %v1958
    %v1965 = vshll.u32 %v1964, 16
    %v1966 = vadd.s32 %v1965, %v1963
    %vm1967 = vcmp.lt.s32.totalorder %v1725, %v1726
    %v1968 = vsel %vm1967, %v1725, %v1726
    %v1969 = vand.u32 %v1968, 65535
    %v1970 = vshra.s32 %v1968, 16
    %v1971 = vcvt.s32.f32 %v1969
    %v1972 = vcvt.s32.f32 %v1970
    %1973 = vmin.xlane.f32.xlu0 %v1972
    %v1974 = vpop.xlane.xlu0 %1973
    %vm1975 = vcmp.eq.f32.partialorder %v1972, %v1974
    %v1976 = vsel %vm1975, %v1971, inf
    %1977 = vmin.xlane.f32.xlu0 %v1976
    %v1978 = vpop.xlane.xlu0 %1977
    %v1979 = vcvt.f32.s32 %v1978
    %v1980 = vcvt.f32.s32 %v1974
    %v1981 = vshll.u32 %v1980, 16
    %v1982 = vadd.s32 %v1981, %v1979
    %vm1983 = vcmask 23568
    %1984 = vst.msk [vmem:[#allocation11] sm:$0xff] %vm1983, %v1617
    %1985 = vst.msk [vmem:[#allocation11 + $0x8] sm:$0xff] %vm1983, %v1620
    %1986 = vst.msk [vmem:[#allocation11 + $0x10] sm:$0xff] %vm1983, %v1623
    %1987 = vst.msk [vmem:[#allocation11 + $0x18] sm:$0xff] %vm1983, %v1626
    %1988 = vst.msk [vmem:[#allocation11 + $0x20] sm:$0xff] %vm1983, %v1629
    %1989 = vst.msk [vmem:[#allocation11 + $0x28] sm:$0xff] %vm1983, %v1632
    %1990 = vst.msk [vmem:[#allocation11 + $0x30] sm:$0xff] %vm1983, %v1635
    %1991 = vst.msk [vmem:[#allocation11 + $0x38] sm:$0xff] %vm1983, %v1638
    %1992 = vst.msk [vmem:[#allocation11 + $0x40] sm:$0xff] %vm1983, %v1641
    %1993 = vst.msk [vmem:[#allocation11 + $0x48] sm:$0xff] %vm1983, %v1644
    %1994 = vst.msk [vmem:[#allocation11 + $0x50] sm:$0xff] %vm1983, %v1647
    %1995 = vst.msk [vmem:[#allocation11 + $0x58] sm:$0xff] %vm1983, %v1650
    %1996 = vst.msk [vmem:[#allocation11 + $0x60] sm:$0xff] %vm1983, %v1653
    %1997 = vst.msk [vmem:[#allocation11 + $0x68] sm:$0xff] %vm1983, %v1656
    %1998 = vst.msk [vmem:[#allocation11 + $0x70] sm:$0xff] %vm1983, %v1659
    %1999 = vst.msk [vmem:[#allocation11 + $0x78] sm:$0xff] %vm1983, %v1662
    %2000 = vst.msk [vmem:[#allocation12] sm:$0xff] %vm1983, %v1742
    %2001 = vst.msk [vmem:[#allocation12 + $0x8] sm:$0xff] %vm1983, %v1758
    %2002 = vst.msk [vmem:[#allocation12 + $0x10] sm:$0xff] %vm1983, %v1774
    %2003 = vst.msk [vmem:[#allocation12 + $0x18] sm:$0xff] %vm1983, %v1790
    %2004 = vst.msk [vmem:[#allocation12 + $0x20] sm:$0xff] %vm1983, %v1806
    %2005 = vst.msk [vmem:[#allocation12 + $0x28] sm:$0xff] %vm1983, %v1822
    %2006 = vst.msk [vmem:[#allocation12 + $0x30] sm:$0xff] %vm1983, %v1838
    %2007 = vst.msk [vmem:[#allocation12 + $0x38] sm:$0xff] %vm1983, %v1854
    %2008 = vst.msk [vmem:[#allocation12 + $0x40] sm:$0xff] %vm1983, %v1870
    %2009 = vst.msk [vmem:[#allocation12 + $0x48] sm:$0xff] %vm1983, %v1886
    %2010 = vst.msk [vmem:[#allocation12 + $0x50] sm:$0xff] %vm1983, %v1902
    %2011 = vst.msk [vmem:[#allocation12 + $0x58] sm:$0xff] %vm1983, %v1918
    %2012 = vst.msk [vmem:[#allocation12 + $0x60] sm:$0xff] %vm1983, %v1934
    %2013 = vst.msk [vmem:[#allocation12 + $0x68] sm:$0xff] %vm1983, %v1950
    %2014 = vst.msk [vmem:[#allocation12 + $0x70] sm:$0xff] %vm1983, %v1966
    %2015 = vst.msk [vmem:[#allocation12 + $0x78] sm:$0xff] %vm1983, %v1982
    %vm2016 = vcmp.eq.s32.totalorder %v669, %v1742
    %vm2017 = vcmp.eq.s32.totalorder %v585, %v1742
    %vm2018 = vcmp.eq.s32.totalorder %v670, %v1758
    %vm2019 = vcmp.eq.s32.totalorder %v585, %v1758
    %vm2020 = vcmp.eq.s32.totalorder %v671, %v1774
    %vm2021 = vcmp.eq.s32.totalorder %v585, %v1774
    %vm2022 = vcmp.eq.s32.totalorder %v672, %v1790
    %vm2023 = vcmp.eq.s32.totalorder %v585, %v1790
    %vm2024 = vcmp.eq.s32.totalorder %v673, %v1806
    %vm2025 = vcmp.eq.s32.totalorder %v585, %v1806
    %vm2026 = vcmp.eq.s32.totalorder %v674, %v1822
    %vm2027 = vcmp.eq.s32.totalorder %v585, %v1822
    %vm2028 = vcmp.eq.s32.totalorder %v675, %v1838
    %vm2029 = vcmp.eq.s32.totalorder %v585, %v1838
    %vm2030 = vcmp.eq.s32.totalorder %v676, %v1854
    %vm2031 = vcmp.eq.s32.totalorder %v585, %v1854
    %vm2032 = vcmp.eq.s32.totalorder %v677, %v1870
    %vm2033 = vcmp.eq.s32.totalorder %v585, %v1870
    %vm2034 = vcmp.eq.s32.totalorder %v678, %v1886
    %vm2035 = vcmp.eq.s32.totalorder %v585, %v1886
    %vm2036 = vcmp.eq.s32.totalorder %v679, %v1902
    %vm2037 = vcmp.eq.s32.totalorder %v585, %v1902
    %vm2038 = vcmp.eq.s32.totalorder %v680, %v1918
    %vm2039 = vcmp.eq.s32.totalorder %v585, %v1918
    %vm2040 = vcmp.eq.s32.totalorder %v681, %v1934
    %vm2041 = vcmp.eq.s32.totalorder %v585, %v1934
    %vm2042 = vcmp.eq.s32.totalorder %v682, %v1950
    %vm2043 = vcmp.eq.s32.totalorder %v585, %v1950
    %vm2044 = vcmp.eq.s32.totalorder %v683, %v1966
    %vm2045 = vcmp.eq.s32.totalorder %v585, %v1966
    %vm2046 = vcmp.eq.s32.totalorder %v684, %v1982
    %vm2047 = vcmp.eq.s32.totalorder %v585, %v1982
    %v2048 = vsel %vm2016, -inf, %v1583
    %v2049 = vsel %vm2017, -inf, %v1584
    %v2050 = vsel %vm2018, -inf, %v1585
    %v2051 = vsel %vm2019, -inf, %v1586
    %v2052 = vsel %vm2020, -inf, %v1587
    %v2053 = vsel %vm2021, -inf, %v1588
    %v2054 = vsel %vm2022, -inf, %v1589
    %v2055 = vsel %vm2023, -inf, %v1590
    %v2056 = vsel %vm2024, -inf, %v1591
    %v2057 = vsel %vm2025, -inf, %v1592
    %v2058 = vsel %vm2026, -inf, %v1593
    %v2059 = vsel %vm2027, -inf, %v1594
    %v2060 = vsel %vm2028, -inf, %v1595
    %v2061 = vsel %vm2029, -inf, %v1596
    %v2062 = vsel %vm2030, -inf, %v1597
    %v2063 = vsel %vm2031, -inf, %v1598
    %v2064 = vsel %vm2032, -inf, %v1599
    %v2065 = vsel %vm2033, -inf, %v1600
    %v2066 = vsel %vm2034, -inf, %v1601
    %v2067 = vsel %vm2035, -inf, %v1602
    %v2068 = vsel %vm2036, -inf, %v1603
    %v2069 = vsel %vm2037, -inf, %v1604
    %v2070 = vsel %vm2038, -inf, %v1605
    %v2071 = vsel %vm2039, -inf, %v1606
    %v2072 = vsel %vm2040, -inf, %v1607
    %v2073 = vsel %vm2041, -inf, %v1608
    %v2074 = vsel %vm2042, -inf, %v1609
    %v2075 = vsel %vm2043, -inf, %v1610
    %v2076 = vsel %vm2044, -inf, %v1611
    %v2077 = vsel %vm2045, -inf, %v1612
    %v2078 = vsel %vm2046, -inf, %v1613
    %v2079 = vsel %vm2047, -inf, %v1614
    %v2080 = vmax.f32 %v2048, %v2049
    %2081 = vmax.xlane.f32.xlu0 %v2080
    %v2082 = vpop.xlane.xlu0 %2081
    %v2083 = vmax.f32 %v2050, %v2051
    %2084 = vmax.xlane.f32.xlu0 %v2083
    %v2085 = vpop.xlane.xlu0 %2084
    %v2086 = vmax.f32 %v2052, %v2053
    %2087 = vmax.xlane.f32.xlu0 %v2086
    %v2088 = vpop.xlane.xlu0 %2087
    %v2089 = vmax.f32 %v2054, %v2055
    %2090 = vmax.xlane.f32.xlu0 %v2089
    %v2091 = vpop.xlane.xlu0 %2090
    %v2092 = vmax.f32 %v2056, %v2057
    %2093 = vmax.xlane.f32.xlu0 %v2092
    %v2094 = vpop.xlane.xlu0 %2093
    %v2095 = vmax.f32 %v2058, %v2059
    %2096 = vmax.xlane.f32.xlu0 %v2095
    %v2097 = vpop.xlane.xlu0 %2096
    %v2098 = vmax.f32 %v2060, %v2061
    %2099 = vmax.xlane.f32.xlu0 %v2098
    %v2100 = vpop.xlane.xlu0 %2099
    %v2101 = vmax.f32 %v2062, %v2063
    %2102 = vmax.xlane.f32.xlu0 %v2101
    %v2103 = vpop.xlane.xlu0 %2102
    %v2104 = vmax.f32 %v2064, %v2065
    %2105 = vmax.xlane.f32.xlu0 %v2104
    %v2106 = vpop.xlane.xlu0 %2105
    %v2107 = vmax.f32 %v2066, %v2067
    %2108 = vmax.xlane.f32.xlu0 %v2107
    %v2109 = vpop.xlane.xlu0 %2108
    %v2110 = vmax.f32 %v2068, %v2069
    %2111 = vmax.xlane.f32.xlu0 %v2110
    %v2112 = vpop.xlane.xlu0 %2111
    %v2113 = vmax.f32 %v2070, %v2071
    %2114 = vmax.xlane.f32.xlu0 %v2113
    %v2115 = vpop.xlane.xlu0 %2114
    %v2116 = vmax.f32 %v2072, %v2073
    %2117 = vmax.xlane.f32.xlu0 %v2116
    %v2118 = vpop.xlane.xlu0 %2117
    %v2119 = vmax.f32 %v2074, %v2075
    %2120 = vmax.xlane.f32.xlu0 %v2119
    %v2121 = vpop.xlane.xlu0 %2120
    %v2122 = vmax.f32 %v2076, %v2077
    %2123 = vmax.xlane.f32.xlu0 %v2122
    %v2124 = vpop.xlane.xlu0 %2123
    %v2125 = vmax.f32 %v2078, %v2079
    %2126 = vmax.xlane.f32.xlu0 %v2125
    %v2127 = vpop.xlane.xlu0 %2126
    %vm2128 = vcmp.eq.f32.partialorder %v2048, %v2082
    %vm2129 = vcmp.eq.f32.partialorder %v2049, %v2082
    %vm2130 = vcmp.eq.f32.partialorder %v2050, %v2085
    %vm2131 = vcmp.eq.f32.partialorder %v2051, %v2085
    %vm2132 = vcmp.eq.f32.partialorder %v2052, %v2088
    %vm2133 = vcmp.eq.f32.partialorder %v2053, %v2088
    %vm2134 = vcmp.eq.f32.partialorder %v2054, %v2091
    %vm2135 = vcmp.eq.f32.partialorder %v2055, %v2091
    %vm2136 = vcmp.eq.f32.partialorder %v2056, %v2094
    %vm2137 = vcmp.eq.f32.partialorder %v2057, %v2094
    %vm2138 = vcmp.eq.f32.partialorder %v2058, %v2097
    %vm2139 = vcmp.eq.f32.partialorder %v2059, %v2097
    %vm2140 = vcmp.eq.f32.partialorder %v2060, %v2100
    %vm2141 = vcmp.eq.f32.partialorder %v2061, %v2100
    %vm2142 = vcmp.eq.f32.partialorder %v2062, %v2103
    %vm2143 = vcmp.eq.f32.partialorder %v2063, %v2103
    %vm2144 = vcmp.eq.f32.partialorder %v2064, %v2106
    %vm2145 = vcmp.eq.f32.partialorder %v2065, %v2106
    %vm2146 = vcmp.eq.f32.partialorder %v2066, %v2109
    %vm2147 = vcmp.eq.f32.partialorder %v2067, %v2109
    %vm2148 = vcmp.eq.f32.partialorder %v2068, %v2112
    %vm2149 = vcmp.eq.f32.partialorder %v2069, %v2112
    %vm2150 = vcmp.eq.f32.partialorder %v2070, %v2115
    %vm2151 = vcmp.eq.f32.partialorder %v2071, %v2115
    %vm2152 = vcmp.eq.f32.partialorder %v2072, %v2118
    %vm2153 = vcmp.eq.f32.partialorder %v2073, %v2118
    %vm2154 = vcmp.eq.f32.partialorder %v2074, %v2121
    %vm2155 = vcmp.eq.f32.partialorder %v2075, %v2121
    %vm2156 = vcmp.eq.f32.partialorder %v2076, %v2124
    %vm2157 = vcmp.eq.f32.partialorder %v2077, %v2124
    %vm2158 = vcmp.eq.f32.partialorder %v2078, %v2127
    %vm2159 = vcmp.eq.f32.partialorder %v2079, %v2127
    %v2160 = vsel %vm2128, %v669, 1073741824
    %v2161 = vsel %vm2129, %v585, 1073741824
    %v2162 = vsel %vm2130, %v670, 1073741824
    %v2163 = vsel %vm2131, %v585, 1073741824
    %v2164 = vsel %vm2132, %v671, 1073741824
    %v2165 = vsel %vm2133, %v585, 1073741824
    %v2166 = vsel %vm2134, %v672, 1073741824
    %v2167 = vsel %vm2135, %v585, 1073741824
    %v2168 = vsel %vm2136, %v673, 1073741824
    %v2169 = vsel %vm2137, %v585, 1073741824
    %v2170 = vsel %vm2138, %v674, 1073741824
    %v2171 = vsel %vm2139, %v585, 1073741824
    %v2172 = vsel %vm2140, %v675, 1073741824
    %v2173 = vsel %vm2141, %v585, 1073741824
    %v2174 = vsel %vm2142, %v676, 1073741824
    %v2175 = vsel %vm2143, %v585, 1073741824
    %v2176 = vsel %vm2144, %v677, 1073741824
    %v2177 = vsel %vm2145, %v585, 1073741824
    %v2178 = vsel %vm2146, %v678, 1073741824
    %v2179 = vsel %vm2147, %v585, 1073741824
    %v2180 = vsel %vm2148, %v679, 1073741824
    %v2181 = vsel %vm2149, %v585, 1073741824
    %v2182 = vsel %vm2150, %v680, 1073741824
    %v2183 = vsel %vm2151, %v585, 1073741824
    %v2184 = vsel %vm2152, %v681, 1073741824
    %v2185 = vsel %vm2153, %v585, 1073741824
    %v2186 = vsel %vm2154, %v682, 1073741824
    %v2187 = vsel %vm2155, %v585, 1073741824
    %v2188 = vsel %vm2156, %v683, 1073741824
    %v2189 = vsel %vm2157, %v585, 1073741824
    %v2190 = vsel %vm2158, %v684, 1073741824
    %v2191 = vsel %vm2159, %v585, 1073741824
    %vm2192 = vcmp.lt.s32.totalorder %v2160, %v2161
    %v2193 = vsel %vm2192, %v2160, %v2161
    %v2194 = vand.u32 %v2193, 65535
    %v2195 = vshra.s32 %v2193, 16
    %v2196 = vcvt.s32.f32 %v2194
    %v2197 = vcvt.s32.f32 %v2195
    %2198 = vmin.xlane.f32.xlu0 %v2197
    %v2199 = vpop.xlane.xlu0 %2198
    %vm2200 = vcmp.eq.f32.partialorder %v2197, %v2199
    %v2201 = vsel %vm2200, %v2196, inf
    %2202 = vmin.xlane.f32.xlu0 %v2201
    %v2203 = vpop.xlane.xlu0 %2202
    %v2204 = vcvt.f32.s32 %v2203
    %v2205 = vcvt.f32.s32 %v2199
    %v2206 = vshll.u32 %v2205, 16
    %v2207 = vadd.s32 %v2206, %v2204
    %vm2208 = vcmp.lt.s32.totalorder %v2162, %v2163
    %v2209 = vsel %vm2208, %v2162, %v2163
    %v2210 = vand.u32 %v2209, 65535
    %v2211 = vshra.s32 %v2209, 16
    %v2212 = vcvt.s32.f32 %v2210
    %v2213 = vcvt.s32.f32 %v2211
    %2214 = vmin.xlane.f32.xlu0 %v2213
    %v2215 = vpop.xlane.xlu0 %2214
    %vm2216 = vcmp.eq.f32.partialorder %v2213, %v2215
    %v2217 = vsel %vm2216, %v2212, inf
    %2218 = vmin.xlane.f32.xlu0 %v2217
    %v2219 = vpop.xlane.xlu0 %2218
    %v2220 = vcvt.f32.s32 %v2219
    %v2221 = vcvt.f32.s32 %v2215
    %v2222 = vshll.u32 %v2221, 16
    %v2223 = vadd.s32 %v2222, %v2220
    %vm2224 = vcmp.lt.s32.totalorder %v2164, %v2165
    %v2225 = vsel %vm2224, %v2164, %v2165
    %v2226 = vand.u32 %v2225, 65535
    %v2227 = vshra.s32 %v2225, 16
    %v2228 = vcvt.s32.f32 %v2226
    %v2229 = vcvt.s32.f32 %v2227
    %2230 = vmin.xlane.f32.xlu0 %v2229
    %v2231 = vpop.xlane.xlu0 %2230
    %vm2232 = vcmp.eq.f32.partialorder %v2229, %v2231
    %v2233 = vsel %vm2232, %v2228, inf
    %2234 = vmin.xlane.f32.xlu0 %v2233
    %v2235 = vpop.xlane.xlu0 %2234
    %v2236 = vcvt.f32.s32 %v2235
    %v2237 = vcvt.f32.s32 %v2231
    %v2238 = vshll.u32 %v2237, 16
    %v2239 = vadd.s32 %v2238, %v2236
    %vm2240 = vcmp.lt.s32.totalorder %v2166, %v2167
    %v2241 = vsel %vm2240, %v2166, %v2167
    %v2242 = vand.u32 %v2241, 65535
    %v2243 = vshra.s32 %v2241, 16
    %v2244 = vcvt.s32.f32 %v2242
    %v2245 = vcvt.s32.f32 %v2243
    %2246 = vmin.xlane.f32.xlu0 %v2245
    %v2247 = vpop.xlane.xlu0 %2246
    %vm2248 = vcmp.eq.f32.partialorder %v2245, %v2247
    %v2249 = vsel %vm2248, %v2244, inf
    %2250 = vmin.xlane.f32.xlu0 %v2249
    %v2251 = vpop.xlane.xlu0 %2250
    %v2252 = vcvt.f32.s32 %v2251
    %v2253 = vcvt.f32.s32 %v2247
    %v2254 = vshll.u32 %v2253, 16
    %v2255 = vadd.s32 %v2254, %v2252
    %vm2256 = vcmp.lt.s32.totalorder %v2168, %v2169
    %v2257 = vsel %vm2256, %v2168, %v2169
    %v2258 = vand.u32 %v2257, 65535
    %v2259 = vshra.s32 %v2257, 16
    %v2260 = vcvt.s32.f32 %v2258
    %v2261 = vcvt.s32.f32 %v2259
    %2262 = vmin.xlane.f32.xlu0 %v2261
    %v2263 = vpop.xlane.xlu0 %2262
    %vm2264 = vcmp.eq.f32.partialorder %v2261, %v2263
    %v2265 = vsel %vm2264, %v2260, inf
    %2266 = vmin.xlane.f32.xlu0 %v2265
    %v2267 = vpop.xlane.xlu0 %2266
    %v2268 = vcvt.f32.s32 %v2267
    %v2269 = vcvt.f32.s32 %v2263
    %v2270 = vshll.u32 %v2269, 16
    %v2271 = vadd.s32 %v2270, %v2268
    %vm2272 = vcmp.lt.s32.totalorder %v2170, %v2171
    %v2273 = vsel %vm2272, %v2170, %v2171
    %v2274 = vand.u32 %v2273, 65535
    %v2275 = vshra.s32 %v2273, 16
    %v2276 = vcvt.s32.f32 %v2274
    %v2277 = vcvt.s32.f32 %v2275
    %2278 = vmin.xlane.f32.xlu0 %v2277
    %v2279 = vpop.xlane.xlu0 %2278
    %vm2280 = vcmp.eq.f32.partialorder %v2277, %v2279
    %v2281 = vsel %vm2280, %v2276, inf
    %2282 = vmin.xlane.f32.xlu0 %v2281
    %v2283 = vpop.xlane.xlu0 %2282
    %v2284 = vcvt.f32.s32 %v2283
    %v2285 = vcvt.f32.s32 %v2279
    %v2286 = vshll.u32 %v2285, 16
    %v2287 = vadd.s32 %v2286, %v2284
    %vm2288 = vcmp.lt.s32.totalorder %v2172, %v2173
    %v2289 = vsel %vm2288, %v2172, %v2173
    %v2290 = vand.u32 %v2289, 65535
    %v2291 = vshra.s32 %v2289, 16
    %v2292 = vcvt.s32.f32 %v2290
    %v2293 = vcvt.s32.f32 %v2291
    %2294 = vmin.xlane.f32.xlu0 %v2293
    %v2295 = vpop.xlane.xlu0 %2294
    %vm2296 = vcmp.eq.f32.partialorder %v2293, %v2295
    %v2297 = vsel %vm2296, %v2292, inf
    %2298 = vmin.xlane.f32.xlu0 %v2297
    %v2299 = vpop.xlane.xlu0 %2298
    %v2300 = vcvt.f32.s32 %v2299
    %v2301 = vcvt.f32.s32 %v2295
    %v2302 = vshll.u32 %v2301, 16
    %v2303 = vadd.s32 %v2302, %v2300
    %vm2304 = vcmp.lt.s32.totalorder %v2174, %v2175
    %v2305 = vsel %vm2304, %v2174, %v2175
    %v2306 = vand.u32 %v2305, 65535
    %v2307 = vshra.s32 %v2305, 16
    %v2308 = vcvt.s32.f32 %v2306
    %v2309 = vcvt.s32.f32 %v2307
    %2310 = vmin.xlane.f32.xlu0 %v2309
    %v2311 = vpop.xlane.xlu0 %2310
    %vm2312 = vcmp.eq.f32.partialorder %v2309, %v2311
    %v2313 = vsel %vm2312, %v2308, inf
    %2314 = vmin.xlane.f32.xlu0 %v2313
    %v2315 = vpop.xlane.xlu0 %2314
    %v2316 = vcvt.f32.s32 %v2315
    %v2317 = vcvt.f32.s32 %v2311
    %v2318 = vshll.u32 %v2317, 16
    %v2319 = vadd.s32 %v2318, %v2316
    %vm2320 = vcmp.lt.s32.totalorder %v2176, %v2177
    %v2321 = vsel %vm2320, %v2176, %v2177
    %v2322 = vand.u32 %v2321, 65535
    %v2323 = vshra.s32 %v2321, 16
    %v2324 = vcvt.s32.f32 %v2322
    %v2325 = vcvt.s32.f32 %v2323
    %2326 = vmin.xlane.f32.xlu0 %v2325
    %v2327 = vpop.xlane.xlu0 %2326
    %vm2328 = vcmp.eq.f32.partialorder %v2325, %v2327
    %v2329 = vsel %vm2328, %v2324, inf
    %2330 = vmin.xlane.f32.xlu0 %v2329
    %v2331 = vpop.xlane.xlu0 %2330
    %v2332 = vcvt.f32.s32 %v2331
    %v2333 = vcvt.f32.s32 %v2327
    %v2334 = vshll.u32 %v2333, 16
    %v2335 = vadd.s32 %v2334, %v2332
    %vm2336 = vcmp.lt.s32.totalorder %v2178, %v2179
    %v2337 = vsel %vm2336, %v2178, %v2179
    %v2338 = vand.u32 %v2337, 65535
    %v2339 = vshra.s32 %v2337, 16
    %v2340 = vcvt.s32.f32 %v2338
    %v2341 = vcvt.s32.f32 %v2339
    %2342 = vmin.xlane.f32.xlu0 %v2341
    %v2343 = vpop.xlane.xlu0 %2342
    %vm2344 = vcmp.eq.f32.partialorder %v2341, %v2343
    %v2345 = vsel %vm2344, %v2340, inf
    %2346 = vmin.xlane.f32.xlu0 %v2345
    %v2347 = vpop.xlane.xlu0 %2346
    %v2348 = vcvt.f32.s32 %v2347
    %v2349 = vcvt.f32.s32 %v2343
    %v2350 = vshll.u32 %v2349, 16
    %v2351 = vadd.s32 %v2350, %v2348
    %vm2352 = vcmp.lt.s32.totalorder %v2180, %v2181
    %v2353 = vsel %vm2352, %v2180, %v2181
    %v2354 = vand.u32 %v2353, 65535
    %v2355 = vshra.s32 %v2353, 16
    %v2356 = vcvt.s32.f32 %v2354
    %v2357 = vcvt.s32.f32 %v2355
    %2358 = vmin.xlane.f32.xlu0 %v2357
    %v2359 = vpop.xlane.xlu0 %2358
    %vm2360 = vcmp.eq.f32.partialorder %v2357, %v2359
    %v2361 = vsel %vm2360, %v2356, inf
    %2362 = vmin.xlane.f32.xlu0 %v2361
    %v2363 = vpop.xlane.xlu0 %2362
    %v2364 = vcvt.f32.s32 %v2363
    %v2365 = vcvt.f32.s32 %v2359
    %v2366 = vshll.u32 %v2365, 16
    %v2367 = vadd.s32 %v2366, %v2364
    %vm2368 = vcmp.lt.s32.totalorder %v2182, %v2183
    %v2369 = vsel %vm2368, %v2182, %v2183
    %v2370 = vand.u32 %v2369, 65535
    %v2371 = vshra.s32 %v2369, 16
    %v2372 = vcvt.s32.f32 %v2370
    %v2373 = vcvt.s32.f32 %v2371
    %2374 = vmin.xlane.f32.xlu0 %v2373
    %v2375 = vpop.xlane.xlu0 %2374
    %vm2376 = vcmp.eq.f32.partialorder %v2373, %v2375
    %v2377 = vsel %vm2376, %v2372, inf
    %2378 = vmin.xlane.f32.xlu0 %v2377
    %v2379 = vpop.xlane.xlu0 %2378
    %v2380 = vcvt.f32.s32 %v2379
    %v2381 = vcvt.f32.s32 %v2375
    %v2382 = vshll.u32 %v2381, 16
    %v2383 = vadd.s32 %v2382, %v2380
    %vm2384 = vcmp.lt.s32.totalorder %v2184, %v2185
    %v2385 = vsel %vm2384, %v2184, %v2185
    %v2386 = vand.u32 %v2385, 65535
    %v2387 = vshra.s32 %v2385, 16
    %v2388 = vcvt.s32.f32 %v2386
    %v2389 = vcvt.s32.f32 %v2387
    %2390 = vmin.xlane.f32.xlu0 %v2389
    %v2391 = vpop.xlane.xlu0 %2390
    %vm2392 = vcmp.eq.f32.partialorder %v2389, %v2391
    %v2393 = vsel %vm2392, %v2388, inf
    %2394 = vmin.xlane.f32.xlu0 %v2393
    %v2395 = vpop.xlane.xlu0 %2394
    %v2396 = vcvt.f32.s32 %v2395
    %v2397 = vcvt.f32.s32 %v2391
    %v2398 = vshll.u32 %v2397, 16
    %v2399 = vadd.s32 %v2398, %v2396
    %vm2400 = vcmp.lt.s32.totalorder %v2186, %v2187
    %v2401 = vsel %vm2400, %v2186, %v2187
    %v2402 = vand.u32 %v2401, 65535
    %v2403 = vshra.s32 %v2401, 16
    %v2404 = vcvt.s32.f32 %v2402
    %v2405 = vcvt.s32.f32 %v2403
    %2406 = vmin.xlane.f32.xlu0 %v2405
    %v2407 = vpop.xlane.xlu0 %2406
    %vm2408 = vcmp.eq.f32.partialorder %v2405, %v2407
    %v2409 = vsel %vm2408, %v2404, inf
    %2410 = vmin.xlane.f32.xlu0 %v2409
    %v2411 = vpop.xlane.xlu0 %2410
    %v2412 = vcvt.f32.s32 %v2411
    %v2413 = vcvt.f32.s32 %v2407
    %v2414 = vshll.u32 %v2413, 16
    %v2415 = vadd.s32 %v2414, %v2412
    %vm2416 = vcmp.lt.s32.totalorder %v2188, %v2189
    %v2417 = vsel %vm2416, %v2188, %v2189
    %v2418 = vand.u32 %v2417, 65535
    %v2419 = vshra.s32 %v2417, 16
    %v2420 = vcvt.s32.f32 %v2418
    %v2421 = vcvt.s32.f32 %v2419
    %2422 = vmin.xlane.f32.xlu0 %v2421
    %v2423 = vpop.xlane.xlu0 %2422
    %vm2424 = vcmp.eq.f32.partialorder %v2421, %v2423
    %v2425 = vsel %vm2424, %v2420, inf
    %2426 = vmin.xlane.f32.xlu0 %v2425
    %v2427 = vpop.xlane.xlu0 %2426
    %v2428 = vcvt.f32.s32 %v2427
    %v2429 = vcvt.f32.s32 %v2423
    %v2430 = vshll.u32 %v2429, 16
    %v2431 = vadd.s32 %v2430, %v2428
    %vm2432 = vcmp.lt.s32.totalorder %v2190, %v2191
    %v2433 = vsel %vm2432, %v2190, %v2191
    %v2434 = vand.u32 %v2433, 65535
    %v2435 = vshra.s32 %v2433, 16
    %v2436 = vcvt.s32.f32 %v2434
    %v2437 = vcvt.s32.f32 %v2435
    %2438 = vmin.xlane.f32.xlu0 %v2437
    %v2439 = vpop.xlane.xlu0 %2438
    %vm2440 = vcmp.eq.f32.partialorder %v2437, %v2439
    %v2441 = vsel %vm2440, %v2436, inf
    %2442 = vmin.xlane.f32.xlu0 %v2441
    %v2443 = vpop.xlane.xlu0 %2442
    %v2444 = vcvt.f32.s32 %v2443
    %v2445 = vcvt.f32.s32 %v2439
    %v2446 = vshll.u32 %v2445, 16
    %v2447 = vadd.s32 %v2446, %v2444
    %vm2448 = vcmask 31768
    %2449 = vst.msk [vmem:[#allocation11] sm:$0xff] %vm2448, %v2082
    %2450 = vst.msk [vmem:[#allocation11 + $0x8] sm:$0xff] %vm2448, %v2085
    %2451 = vst.msk [vmem:[#allocation11 + $0x10] sm:$0xff] %vm2448, %v2088
    %2452 = vst.msk [vmem:[#allocation11 + $0x18] sm:$0xff] %vm2448, %v2091
    %2453 = vst.msk [vmem:[#allocation11 + $0x20] sm:$0xff] %vm2448, %v2094
    %2454 = vst.msk [vmem:[#allocation11 + $0x28] sm:$0xff] %vm2448, %v2097
    %2455 = vst.msk [vmem:[#allocation11 + $0x30] sm:$0xff] %vm2448, %v2100
    %2456 = vst.msk [vmem:[#allocation11 + $0x38] sm:$0xff] %vm2448, %v2103
    %2457 = vst.msk [vmem:[#allocation11 + $0x40] sm:$0xff] %vm2448, %v2106
    %2458 = vst.msk [vmem:[#allocation11 + $0x48] sm:$0xff] %vm2448, %v2109
    %2459 = vst.msk [vmem:[#allocation11 + $0x50] sm:$0xff] %vm2448, %v2112
    %2460 = vst.msk [vmem:[#allocation11 + $0x58] sm:$0xff] %vm2448, %v2115
    %2461 = vst.msk [vmem:[#allocation11 + $0x60] sm:$0xff] %vm2448, %v2118
    %2462 = vst.msk [vmem:[#allocation11 + $0x68] sm:$0xff] %vm2448, %v2121
    %2463 = vst.msk [vmem:[#allocation11 + $0x70] sm:$0xff] %vm2448, %v2124
    %2464 = vst.msk [vmem:[#allocation11 + $0x78] sm:$0xff] %vm2448, %v2127
    %2465 = vst.msk [vmem:[#allocation12] sm:$0xff] %vm2448, %v2207
    %2466 = vst.msk [vmem:[#allocation12 + $0x8] sm:$0xff] %vm2448, %v2223
    %2467 = vst.msk [vmem:[#allocation12 + $0x10] sm:$0xff] %vm2448, %v2239
    %2468 = vst.msk [vmem:[#allocation12 + $0x18] sm:$0xff] %vm2448, %v2255
    %2469 = vst.msk [vmem:[#allocation12 + $0x20] sm:$0xff] %vm2448, %v2271
    %2470 = vst.msk [vmem:[#allocation12 + $0x28] sm:$0xff] %vm2448, %v2287
    %2471 = vst.msk [vmem:[#allocation12 + $0x30] sm:$0xff] %vm2448, %v2303
    %2472 = vst.msk [vmem:[#allocation12 + $0x38] sm:$0xff] %vm2448, %v2319
    %2473 = vst.msk [vmem:[#allocation12 + $0x40] sm:$0xff] %vm2448, %v2335
    %2474 = vst.msk [vmem:[#allocation12 + $0x48] sm:$0xff] %vm2448, %v2351
    %2475 = vst.msk [vmem:[#allocation12 + $0x50] sm:$0xff] %vm2448, %v2367
    %2476 = vst.msk [vmem:[#allocation12 + $0x58] sm:$0xff] %vm2448, %v2383
    %2477 = vst.msk [vmem:[#allocation12 + $0x60] sm:$0xff] %vm2448, %v2399
    %2478 = vst.msk [vmem:[#allocation12 + $0x68] sm:$0xff] %vm2448, %v2415
    %2479 = vst.msk [vmem:[#allocation12 + $0x70] sm:$0xff] %vm2448, %v2431
    %2480 = vst.msk [vmem:[#allocation12 + $0x78] sm:$0xff] %vm2448, %v2447
    // Predicated region
    $region42: #{tpu_custom_call.1} parent=1 // pred_check
      %p2481 = pneg %p80
    $region43: #{tpu_custom_call.1} parent=1 // pred_check_branch
      %2483 = sbr.rel (%p2481) target = $region45
    $region44: #{tpu_custom_call.1} parent=1 // pred_region
      %v2484 = vld [vmem:[#allocation11] sm:$0xff]
      %v2485 = vld [vmem:[#allocation11 + $0x8] sm:$0xff]
      %v2486 = vld [vmem:[#allocation11 + $0x10] sm:$0xff]
      %v2487 = vld [vmem:[#allocation11 + $0x18] sm:$0xff]
      %v2488 = vld [vmem:[#allocation11 + $0x20] sm:$0xff]
      %v2489 = vld [vmem:[#allocation11 + $0x28] sm:$0xff]
      %v2490 = vld [vmem:[#allocation11 + $0x30] sm:$0xff]
      %v2491 = vld [vmem:[#allocation11 + $0x38] sm:$0xff]
      %v2492 = vld [vmem:[#allocation11 + $0x40] sm:$0xff]
      %v2493 = vld [vmem:[#allocation11 + $0x48] sm:$0xff]
      %v2494 = vld [vmem:[#allocation11 + $0x50] sm:$0xff]
      %v2495 = vld [vmem:[#allocation11 + $0x58] sm:$0xff]
      %v2496 = vld [vmem:[#allocation11 + $0x60] sm:$0xff]
      %v2497 = vld [vmem:[#allocation11 + $0x68] sm:$0xff]
      %v2498 = vld [vmem:[#allocation11 + $0x70] sm:$0xff]
      %v2499 = vld [vmem:[#allocation11 + $0x78] sm:$0xff]
      %vm2500 = vcmp.le.f32.partialorder %v2484, -1e+29
      %vm2501 = vcmp.le.f32.partialorder %v2485, -1e+29
      %vm2502 = vcmp.le.f32.partialorder %v2486, -1e+29
      %vm2503 = vcmp.le.f32.partialorder %v2487, -1e+29
      %vm2504 = vcmp.le.f32.partialorder %v2488, -1e+29
      %vm2505 = vcmp.le.f32.partialorder %v2489, -1e+29
      %vm2506 = vcmp.le.f32.partialorder %v2490, -1e+29
      %vm2507 = vcmp.le.f32.partialorder %v2491, -1e+29
      %vm2508 = vcmp.le.f32.partialorder %v2492, -1e+29
      %vm2509 = vcmp.le.f32.partialorder %v2493, -1e+29
      %vm2510 = vcmp.le.f32.partialorder %v2494, -1e+29
      %vm2511 = vcmp.le.f32.partialorder %v2495, -1e+29
      %vm2512 = vcmp.le.f32.partialorder %v2496, -1e+29
      %vm2513 = vcmp.le.f32.partialorder %v2497, -1e+29
      %vm2514 = vcmp.le.f32.partialorder %v2498, -1e+29
      %vm2515 = vcmp.le.f32.partialorder %v2499, -1e+29
      %v2516 = vsel %vm2500, -inf, %v2484
      %v2517 = vsel %vm2501, -inf, %v2485
      %v2518 = vsel %vm2502, -inf, %v2486
      %v2519 = vsel %vm2503, -inf, %v2487
      %v2520 = vsel %vm2504, -inf, %v2488
      %v2521 = vsel %vm2505, -inf, %v2489
      %v2522 = vsel %vm2506, -inf, %v2490
      %v2523 = vsel %vm2507, -inf, %v2491
      %v2524 = vsel %vm2508, -inf, %v2492
      %v2525 = vsel %vm2509, -inf, %v2493
      %v2526 = vsel %vm2510, -inf, %v2494
      %v2527 = vsel %vm2511, -inf, %v2495
      %v2528 = vsel %vm2512, -inf, %v2496
      %v2529 = vsel %vm2513, -inf, %v2497
      %v2530 = vsel %vm2514, -inf, %v2498
      %v2531 = vsel %vm2515, -inf, %v2499
      %2532 = vst [vmem:[#allocation11] sm:$0xff] %v2516
      %2533 = vst [vmem:[#allocation11 + $0x8] sm:$0xff] %v2517
      %2534 = vst [vmem:[#allocation11 + $0x10] sm:$0xff] %v2518
      %2535 = vst [vmem:[#allocation11 + $0x18] sm:$0xff] %v2519
      %2536 = vst [vmem:[#allocation11 + $0x20] sm:$0xff] %v2520
      %2537 = vst [vmem:[#allocation11 + $0x28] sm:$0xff] %v2521
      %2538 = vst [vmem:[#allocation11 + $0x30] sm:$0xff] %v2522
      %2539 = vst [vmem:[#allocation11 + $0x38] sm:$0xff] %v2523
      %2540 = vst [vmem:[#allocation11 + $0x40] sm:$0xff] %v2524
      %2541 = vst [vmem:[#allocation11 + $0x48] sm:$0xff] %v2525
      %2542 = vst [vmem:[#allocation11 + $0x50] sm:$0xff] %v2526
      %2543 = vst [vmem:[#allocation11 + $0x58] sm:$0xff] %v2527
      %2544 = vst [vmem:[#allocation11 + $0x60] sm:$0xff] %v2528
      %2545 = vst [vmem:[#allocation11 + $0x68] sm:$0xff] %v2529
      %2546 = vst [vmem:[#allocation11 + $0x70] sm:$0xff] %v2530
      %2547 = vst [vmem:[#allocation11 + $0x78] sm:$0xff] %v2531
    $region45: #{tpu_custom_call.1} parent=1 // pred_fallthru
      _
    // Predicated region
    $region46: #{tpu_custom_call.1} parent=1 // pred_check
      _
    $region47: #{tpu_custom_call.1} parent=1 // pred_check_branch
      %2549 = sbr.rel (0) target = $region49
    $region48: #{tpu_custom_call.1} parent=1 // pred_region
      %s2551 = ssub.s32 2048, 2048
      %2552 = vsyncadd [#allocation5], %s2551
      %s2553 = sshll.u32 [#allocation11], 4
      %s2554 = int_to_ptr.vmem [resolvable:$true] %s2553
      %2559 = dma.vmem_to_hbm [thread:$0]  %s2554, 2048, %s5, [#allocation5], 128, 128, 8
    $region49: #{tpu_custom_call.1} parent=1 // pred_fallthru
      _
    // Predicated region
    $region50: #{tpu_custom_call.1} parent=1 // pred_check
      _
    $region51: #{tpu_custom_call.1} parent=1 // pred_check_branch
      %2561 = sbr.rel (0) target = $region53
    $region52: #{tpu_custom_call.1} parent=1 // pred_region
      %s2563 = ssub.s32 2048, 2048
      %2564 = vsyncadd [#allocation13], %s2563
      %s2565 = sshll.u32 [#allocation12], 4
      %s2566 = int_to_ptr.vmem [resolvable:$true] %s2565
      %2571 = dma.vmem_to_hbm [thread:$0]  %s2566, 2048, %s6, [#allocation13], 128, 128, 8
    $region53: #{tpu_custom_call.1} parent=1 // pred_fallthru
      _
    // Predicated region
    $region54: #{tpu_custom_call.1} parent=1 // pred_check
      _
    $region55: #{tpu_custom_call.1} parent=1 // pred_check_branch
      %2573 = sbr.rel (0) target = $region57
    $region56: #{tpu_custom_call.1} parent=1 // pred_region
      %2574 = dma.done [#allocation5], 2048
    $region57: #{tpu_custom_call.1} parent=1 // pred_fallthru
      _
    // Predicated region
    $region58: #{tpu_custom_call.1} parent=1 // pred_check
      _
    $region59: #{tpu_custom_call.1} parent=1 // pred_check_branch
      %2576 = sbr.rel (0) target = $region61
    $region60: #{tpu_custom_call.1} parent=1 // pred_region
      %2577 = dma.done [#allocation13], 2048
    $region61: #{tpu_custom_call.1} parent=1 // pred_fallthru
      _
    %2578 = vsyncpa [#allocation4], 1
    %2579 = vsyncpa [#allocation7], 1
    %2580 = vsyncpa [#allocation10], 1
    %2581 = vsyncpa [#allocation5], 1
    %2582 = vsyncpa [#allocation13], 1

</llo_original>
